<compile_context>
chip_gen: v5e
topology: v5e:2x2
jax: 0.10.0
libtpu: 0.0.40
codegen_flags: <defaults>
</compile_context>

<pallas_src>
import math

import jax
import jax.numpy as jnp
from jax.experimental import pallas as pl
from jax.experimental.pallas import tpu as pltpu

DIMS = [784, 512, 256, 128, 64, 10]      # logical (PyTorch) layer sizes
PDIMS = [896, 512, 256, 128, 128, 128]   # lane/MXU-aligned padded sizes
MAX_BATCH_TILE = 256                     # rows per grid step (MXU-height friendly)


def _round_up(x, m):
    return ((x + m - 1) // m) * m


def mlp_kernel(x_ref,
               w1_ref, b1_ref, w2_ref, b2_ref, w3_ref, b3_ref,
               w4_ref, b4_ref, w5_ref, b5_ref,
               o_ref):
    """Fused 5-layer MLP forward for one batch tile; all padded weights resident in VMEM."""
    h = x_ref[...]  # (bt, 896) bf16

    def dense(h, w_ref, b_ref, relu):
        # bf16 x bf16 matmul, f32 accumulation; bias add + ReLU stay in f32 (VPU f32).
        y = jnp.dot(h, w_ref[...], preferred_element_type=jnp.float32) + b_ref[...]
        if relu:
            y = jnp.maximum(y, 0.0)
        return y

    h = dense(h, w1_ref, b1_ref, True).astype(jnp.bfloat16)
    h = dense(h, w2_ref, b2_ref, True).astype(jnp.bfloat16)
    h = dense(h, w3_ref, b3_ref, True).astype(jnp.bfloat16)
    h = dense(h, w4_ref, b4_ref, True).astype(jnp.bfloat16)
    # Final layer: no ReLU; lane-dense 128-wide f32 store (real logits = cols [:10]).
    o_ref[...] = dense(h, w5_ref, b5_ref, False)


def _pack_params(params):
    """Zero-pad every layer to PDIMS; weights -> bf16, biases stay f32 (1, out_padded)."""
    packed = []
    for l, (w, b) in enumerate(params):
        fin, fout = DIMS[l], DIMS[l + 1]
        pin, pout = PDIMS[l], PDIMS[l + 1]
        wp = jnp.zeros((pin, pout), jnp.bfloat16).at[:fin, :fout].set(
            w.astype(jnp.bfloat16))
        bp = jnp.zeros((1, pout), jnp.float32).at[:, :fout].set(
            b.astype(jnp.float32))
        packed += [wp, bp]
    return packed


@jax.jit
def net_forward(x, params):
    """x: any shape with trailing elements = 784 (flattened to (-1, 784)).

    params: list of (W, b) with W of shape (in, out), b of shape (1, out), f32.
    Returns f32 logits of shape (B, 10).
    """
    x = x.reshape(-1, DIMS[0]).astype(jnp.float32)   # mirrors torch's x.view(-1, 784)
    B = x.shape[0]

    # Batch tile: up to 256 rows, multiple of 16 (bf16 sublane packing); pad ragged B.
    bt = min(MAX_BATCH_TILE, _round_up(max(B, 1), 16))
    B_pad = _round_up(B, bt)

    xp = jnp.zeros((B_pad, PDIMS[0]), jnp.bfloat16)
    xp = xp.at[:B, :DIMS[0]].set(x.astype(jnp.bfloat16))

    flat_params = _pack_params(params)

    # Whole (padded) weight/bias tensors resident in VMEM, replicated across grid steps.
    weight_specs = [pl.BlockSpec(a.shape, lambda i: (0, 0)) for a in flat_params]

    flops = 2 * B_pad * sum(PDIMS[l] * PDIMS[l + 1] for l in range(len(PDIMS) - 1))
    bytes_accessed = (xp.size * xp.dtype.itemsize
                      + sum(a.size * a.dtype.itemsize for a in flat_params)
                      + B_pad * PDIMS[-1] * 4)

    out = pl.pallas_call(
        mlp_kernel,
        out_shape=jax.ShapeDtypeStruct((B_pad, PDIMS[-1]), jnp.float32),
        grid_spec=pltpu.PrefetchScalarGridSpec(
            num_scalar_prefetch=0,
            grid=(B_pad // bt,),
            in_specs=[pl.BlockSpec((bt, PDIMS[0]), lambda i: (i, 0))] + weight_specs,
            out_specs=pl.BlockSpec((bt, PDIMS[-1]), lambda i: (i, 0)),
        ),
        compiler_params=pltpu.CompilerParams(
            dimension_semantics=("parallel",)),   # megacore-shard batch axis on v7x
        cost_estimate=pl.CostEstimate(
            flops=flops, transcendentals=0, bytes_accessed=bytes_accessed),
    )(xp, *flat_params)

    return out[:B, :DIMS[-1]]


def init_params(key):
    """Deterministic init matching PyTorch Linear shapes (stored as (in, out)), f32."""
    params = []
    for fan_in, fan_out in zip(DIMS[:-1], DIMS[1:]):
        kw, kb, key = jax.random.split(key, 3)
        bound = 1.0 / math.sqrt(fan_in)
        w = jax.random.uniform(kw, (fan_in, fan_out), jnp.float32, -bound, bound)
        b = jax.random.uniform(kb, (1, fan_out), jnp.float32, -bound, bound)
        params.append((w, b))
    return params


def net_forward_ref(x, params):
    """Pure-JAX reference mirroring the kernel's bf16 storage / f32 accumulation."""
    h = x.reshape(-1, DIMS[0]).astype(jnp.bfloat16)
    y = None
    for i, (w, b) in enumerate(params):
        w16 = w.astype(jnp.bfloat16).astype(jnp.float32)
        y = jnp.dot(h.astype(jnp.float32), w16) + b.astype(jnp.float32)
        if i < len(params) - 1:
            y = jnp.maximum(y, 0.0)
        h = y.astype(jnp.bfloat16)
    return y


if __name__ == "__main__":
    key = jax.random.PRNGKey(0)
    key_x, key_p = jax.random.split(key)

    params = init_params(key_p)

    # Small MNIST-like input: batch=8, image 1x28x28 (flattens to 784).
    x = jax.random.normal(key_x, (8, 1, 28, 28), jnp.float32)

    out = jax.block_until_ready(net_forward(x, params))
    ref = net_forward_ref(x, params)

    assert out.shape == (8, 10)
    assert jnp.allclose(out, ref, atol=1e-2, rtol=1e-2), "mismatch vs reference"

    print("KERNEL_OK")
</pallas_src>

<mosaic_0001>
module attributes {stable_mosaic.version = 11 : i64} {
  func.func @mlp_kernel(%arg0: i32, %arg1: memref<16x896xbf16, #tpu.memory_space<vmem>>, %arg2: memref<896x512xbf16, #tpu.memory_space<vmem>>, %arg3: memref<1x512xf32, #tpu.memory_space<vmem>>, %arg4: memref<512x256xbf16, #tpu.memory_space<vmem>>, %arg5: memref<1x256xf32, #tpu.memory_space<vmem>>, %arg6: memref<256x128xbf16, #tpu.memory_space<vmem>>, %arg7: memref<1x128xf32, #tpu.memory_space<vmem>>, %arg8: memref<128x128xbf16, #tpu.memory_space<vmem>>, %arg9: memref<1x128xf32, #tpu.memory_space<vmem>>, %arg10: memref<128x128xbf16, #tpu.memory_space<vmem>>, %arg11: memref<1x128xf32, #tpu.memory_space<vmem>>, %arg12: memref<16x128xf32, #tpu.memory_space<vmem>>) attributes {dimension_semantics = [#tpu.dimension_semantics<parallel>], iteration_bounds = array<i64: 1>, scalar_prefetch = 0 : i64, scratch_operands = 0 : i64, tpu.core_type = #tpu.core_type<tc>, window_params = [{transform_indices = @transform_0, window_bounds = array<i64: 16, 896>}, {pipeline_mode = #tpu.pipeline_mode<synchronous>, transform_indices = @transform_1, window_bounds = array<i64: 896, 512>}, {pipeline_mode = #tpu.pipeline_mode<synchronous>, transform_indices = @transform_2, window_bounds = array<i64: 1, 512>}, {pipeline_mode = #tpu.pipeline_mode<synchronous>, transform_indices = @transform_3, window_bounds = array<i64: 512, 256>}, {pipeline_mode = #tpu.pipeline_mode<synchronous>, transform_indices = @transform_4, window_bounds = array<i64: 1, 256>}, {pipeline_mode = #tpu.pipeline_mode<synchronous>, transform_indices = @transform_5, window_bounds = array<i64: 256, 128>}, {pipeline_mode = #tpu.pipeline_mode<synchronous>, transform_indices = @transform_6, window_bounds = array<i64: 1, 128>}, {pipeline_mode = #tpu.pipeline_mode<synchronous>, transform_indices = @transform_7, window_bounds = array<i64: 128, 128>}, {pipeline_mode = #tpu.pipeline_mode<synchronous>, transform_indices = @transform_8, window_bounds = array<i64: 1, 128>}, {pipeline_mode = #tpu.pipeline_mode<synchronous>, transform_indices = @transform_9, window_bounds = array<i64: 128, 128>}, {pipeline_mode = #tpu.pipeline_mode<synchronous>, transform_indices = @transform_10, window_bounds = array<i64: 1, 128>}, {transform_indices = @transform_11, window_bounds = array<i64: 16, 128>}]} {
    %c0 = arith.constant 0 : index
    %c0_0 = arith.constant 0 : index
    %0 = vector.load %arg1[%c0, %c0_0] : memref<16x896xbf16, #tpu.memory_space<vmem>>, vector<16x896xbf16>
    %c0_1 = arith.constant 0 : index
    %c0_2 = arith.constant 0 : index
    %1 = vector.load %arg2[%c0_1, %c0_2] : memref<896x512xbf16, #tpu.memory_space<vmem>>, vector<896x512xbf16>
    %cst = arith.constant dense<0.000000e+00> : vector<16x512xf32>
    %2 = tpu.matmul %0, %1, %cst {dimension_numbers = #tpu.dot_dimension_numbers<[1], [0], [0], [1], [0, 0, 1, 1], [], []>} : vector<16x896xbf16>, vector<896x512xbf16>, vector<16x512xf32> -> vector<16x512xf32>
    %c0_3 = arith.constant 0 : index
    %c0_4 = arith.constant 0 : index
    %3 = vector.load %arg3[%c0_3, %c0_4] : memref<1x512xf32, #tpu.memory_space<vmem>>, vector<1x512xf32>
    %4 = vector.broadcast %3 : vector<1x512xf32> to vector<16x512xf32>
    %5 = arith.addf %2, %4 : vector<16x512xf32>
    %cst_5 = arith.constant 0.000000e+00 : f32
    %6 = vector.broadcast %cst_5 : f32 to vector<16x512xf32>
    %7 = arith.maximumf %5, %6 : vector<16x512xf32>
    %8 = arith.truncf %7 : vector<16x512xf32> to vector<16x512xbf16>
    %c0_6 = arith.constant 0 : index
    %c0_7 = arith.constant 0 : index
    %9 = vector.load %arg4[%c0_6, %c0_7] : memref<512x256xbf16, #tpu.memory_space<vmem>>, vector<512x256xbf16>
    %cst_8 = arith.constant dense<0.000000e+00> : vector<16x256xf32>
    %10 = tpu.matmul %8, %9, %cst_8 {dimension_numbers = #tpu.dot_dimension_numbers<[1], [0], [0], [1], [0, 0, 1, 1], [], []>} : vector<16x512xbf16>, vector<512x256xbf16>, vector<16x256xf32> -> vector<16x256xf32>
    %c0_9 = arith.constant 0 : index
    %c0_10 = arith.constant 0 : index
    %11 = vector.load %arg5[%c0_9, %c0_10] : memref<1x256xf32, #tpu.memory_space<vmem>>, vector<1x256xf32>
    %12 = vector.broadcast %11 : vector<1x256xf32> to vector<16x256xf32>
    %13 = arith.addf %10, %12 : vector<16x256xf32>
    %cst_11 = arith.constant 0.000000e+00 : f32
    %14 = vector.broadcast %cst_11 : f32 to vector<16x256xf32>
    %15 = arith.maximumf %13, %14 : vector<16x256xf32>
    %16 = arith.truncf %15 : vector<16x256xf32> to vector<16x256xbf16>
    %c0_12 = arith.constant 0 : index
    %c0_13 = arith.constant 0 : index
    %17 = vector.load %arg6[%c0_12, %c0_13] : memref<256x128xbf16, #tpu.memory_space<vmem>>, vector<256x128xbf16>
    %cst_14 = arith.constant dense<0.000000e+00> : vector<16x128xf32>
    %18 = tpu.matmul %16, %17, %cst_14 {dimension_numbers = #tpu.dot_dimension_numbers<[1], [0], [0], [1], [0, 0, 1, 1], [], []>} : vector<16x256xbf16>, vector<256x128xbf16>, vector<16x128xf32> -> vector<16x128xf32>
    %c0_15 = arith.constant 0 : index
    %c0_16 = arith.constant 0 : index
    %19 = vector.load %arg7[%c0_15, %c0_16] : memref<1x128xf32, #tpu.memory_space<vmem>>, vector<1x128xf32>
    %20 = vector.broadcast %19 : vector<1x128xf32> to vector<16x128xf32>
    %21 = arith.addf %18, %20 : vector<16x128xf32>
    %cst_17 = arith.constant 0.000000e+00 : f32
    %22 = vector.broadcast %cst_17 : f32 to vector<16x128xf32>
    %23 = arith.maximumf %21, %22 : vector<16x128xf32>
    %24 = arith.truncf %23 : vector<16x128xf32> to vector<16x128xbf16>
    %c0_18 = arith.constant 0 : index
    %c0_19 = arith.constant 0 : index
    %25 = vector.load %arg8[%c0_18, %c0_19] : memref<128x128xbf16, #tpu.memory_space<vmem>>, vector<128x128xbf16>
    %cst_20 = arith.constant dense<0.000000e+00> : vector<16x128xf32>
    %26 = tpu.matmul %24, %25, %cst_20 {dimension_numbers = #tpu.dot_dimension_numbers<[1], [0], [0], [1], [0, 0, 1, 1], [], []>} : vector<16x128xbf16>, vector<128x128xbf16>, vector<16x128xf32> -> vector<16x128xf32>
    %c0_21 = arith.constant 0 : index
    %c0_22 = arith.constant 0 : index
    %27 = vector.load %arg9[%c0_21, %c0_22] : memref<1x128xf32, #tpu.memory_space<vmem>>, vector<1x128xf32>
    %28 = vector.broadcast %27 : vector<1x128xf32> to vector<16x128xf32>
    %29 = arith.addf %26, %28 : vector<16x128xf32>
    %cst_23 = arith.constant 0.000000e+00 : f32
    %30 = vector.broadcast %cst_23 : f32 to vector<16x128xf32>
    %31 = arith.maximumf %29, %30 : vector<16x128xf32>
    %32 = arith.truncf %31 : vector<16x128xf32> to vector<16x128xbf16>
    %c0_24 = arith.constant 0 : index
    %c0_25 = arith.constant 0 : index
    %33 = vector.load %arg10[%c0_24, %c0_25] : memref<128x128xbf16, #tpu.memory_space<vmem>>, vector<128x128xbf16>
    %cst_26 = arith.constant dense<0.000000e+00> : vector<16x128xf32>
    %34 = tpu.matmul %32, %33, %cst_26 {dimension_numbers = #tpu.dot_dimension_numbers<[1], [0], [0], [1], [0, 0, 1, 1], [], []>} : vector<16x128xbf16>, vector<128x128xbf16>, vector<16x128xf32> -> vector<16x128xf32>
    %c0_27 = arith.constant 0 : index
    %c0_28 = arith.constant 0 : index
    %35 = vector.load %arg11[%c0_27, %c0_28] : memref<1x128xf32, #tpu.memory_space<vmem>>, vector<1x128xf32>
    %36 = vector.broadcast %35 : vector<1x128xf32> to vector<16x128xf32>
    %37 = arith.addf %34, %36 : vector<16x128xf32>
    %c0_29 = arith.constant 0 : index
    %c0_30 = arith.constant 0 : index
    %38 = vector.load %arg12[%c0_29, %c0_30] : memref<16x128xf32, #tpu.memory_space<vmem>>, vector<16x128xf32>
    tpu.vector_store %arg12[%c0_29, %c0_30], %37 {strides = array<i32>} : memref<16x128xf32, #tpu.memory_space<vmem>>, vector<16x128xf32>,
    return
  }
  func.func @transform_0(%arg0: i32) -> (i32, i32) {
    %c0_i32 = arith.constant 0 : i32
    %c0_i32_0 = arith.constant 0 : i32
    return %arg0, %c0_i32 : i32, i32
  }
  func.func @transform_1(%arg0: i32) -> (i32, i32) {
    %c0_i32 = arith.constant 0 : i32
    %c0_i32_0 = arith.constant 0 : i32
    %c0_i32_1 = arith.constant 0 : i32
    return %c0_i32, %c0_i32_0 : i32, i32
  }
  func.func @transform_2(%arg0: i32) -> (i32, i32) {
    %c0_i32 = arith.constant 0 : i32
    %c0_i32_0 = arith.constant 0 : i32
    %c0_i32_1 = arith.constant 0 : i32
    return %c0_i32, %c0_i32_0 : i32, i32
  }
  func.func @transform_3(%arg0: i32) -> (i32, i32) {
    %c0_i32 = arith.constant 0 : i32
    %c0_i32_0 = arith.constant 0 : i32
    %c0_i32_1 = arith.constant 0 : i32
    return %c0_i32, %c0_i32_0 : i32, i32
  }
  func.func @transform_4(%arg0: i32) -> (i32, i32) {
    %c0_i32 = arith.constant 0 : i32
    %c0_i32_0 = arith.constant 0 : i32
    %c0_i32_1 = arith.constant 0 : i32
    return %c0_i32, %c0_i32_0 : i32, i32
  }
  func.func @transform_5(%arg0: i32) -> (i32, i32) {
    %c0_i32 = arith.constant 0 : i32
    %c0_i32_0 = arith.constant 0 : i32
    %c0_i32_1 = arith.constant 0 : i32
    return %c0_i32, %c0_i32_0 : i32, i32
  }
  func.func @transform_6(%arg0: i32) -> (i32, i32) {
    %c0_i32 = arith.constant 0 : i32
    %c0_i32_0 = arith.constant 0 : i32
    %c0_i32_1 = arith.constant 0 : i32
    return %c0_i32, %c0_i32_0 : i32, i32
  }
  func.func @transform_7(%arg0: i32) -> (i32, i32) {
    %c0_i32 = arith.constant 0 : i32
    %c0_i32_0 = arith.constant 0 : i32
    %c0_i32_1 = arith.constant 0 : i32
    return %c0_i32, %c0_i32_0 : i32, i32
  }
  func.func @transform_8(%arg0: i32) -> (i32, i32) {
    %c0_i32 = arith.constant 0 : i32
    %c0_i32_0 = arith.constant 0 : i32
    %c0_i32_1 = arith.constant 0 : i32
    return %c0_i32, %c0_i32_0 : i32, i32
  }
  func.func @transform_9(%arg0: i32) -> (i32, i32) {
    %c0_i32 = arith.constant 0 : i32
    %c0_i32_0 = arith.constant 0 : i32
    %c0_i32_1 = arith.constant 0 : i32
    return %c0_i32, %c0_i32_0 : i32, i32
  }
  func.func @transform_10(%arg0: i32) -> (i32, i32) {
    %c0_i32 = arith.constant 0 : i32
    %c0_i32_0 = arith.constant 0 : i32
    %c0_i32_1 = arith.constant 0 : i32
    return %c0_i32, %c0_i32_0 : i32, i32
  }
  func.func @transform_11(%arg0: i32) -> (i32, i32) {
    %c0_i32 = arith.constant 0 : i32
    %c0_i32_0 = arith.constant 0 : i32
    return %arg0, %c0_i32 : i32, i32
  }
}

</mosaic_0001>

<llo_original>
// kernel: net_forward.1
$region0: #{net_forward.1}
  #allocation0 [shape = 'u32[]', space=smem, size = 0x4, offset = 0x4, fixed_abs, tag = 'smem constant byte address 0x4 - core index']
  #allocation1 [shape = 'u32[72,128]{1,0:T(1,128)}', space=vmem, size = 0x9000, scoped, tag = 'internal scratch']
  %s0 = inlined_call_operand.vmem [shape: bf16[16,896], index: 0, kind: input, shape index: {}]
  %s1 = inlined_call_operand.vmem [shape: bf16[896,512], index: 1, kind: input, shape index: {}]
  %s2 = inlined_call_operand.vmem [shape: f32[1,512], index: 2, kind: input, shape index: {}]
  %s3 = inlined_call_operand.vmem [shape: bf16[512,256], index: 3, kind: input, shape index: {}]
  %s4 = inlined_call_operand.vmem [shape: f32[1,256], index: 4, kind: input, shape index: {}]
  %s5 = inlined_call_operand.vmem [shape: bf16[256,128], index: 5, kind: input, shape index: {}]
  %s6 = inlined_call_operand.vmem [shape: f32[1,128], index: 6, kind: input, shape index: {}]
  %s7 = inlined_call_operand.vmem [shape: bf16[128,128], index: 7, kind: input, shape index: {}]
  %s8 = inlined_call_operand.vmem [shape: f32[1,128], index: 8, kind: input, shape index: {}]
  %s9 = inlined_call_operand.vmem [shape: bf16[128,128], index: 9, kind: input, shape index: {}]
  %s10 = inlined_call_operand.vmem [shape: f32[1,128], index: 10, kind: input, shape index: {}]
  %s11 = inlined_call_operand.vmem [shape: f32[16,128], index: 11, kind: output, shape index: {}]
  %s12 = sld [smem:[#allocation0]]
  $region54: #{net_forward.1} parent=0
    _
  %s14 = ssub.s32 1, %s12
  %s15 = scalar_select 0, %s14, %s12
  // Predicated region
  $region2: #{net_forward.1} parent=0 // pred_check
    _
  $region3: #{net_forward.1} parent=0 // pred_check_branch
    %17 = sbr.rel (0) target = $region5
  $region4: #{net_forward.1} parent=0 // pred_region
    _
  $region5: #{net_forward.1} parent=0 // pred_fallthru
    _
  // Predicated region
  $region6: #{net_forward.1} parent=0 // pred_check
    _
  $region7: #{net_forward.1} parent=0 // pred_check_branch
    %19 = sbr.rel (0) target = $region9
  $region8: #{net_forward.1} parent=0 // pred_region
    _
  $region9: #{net_forward.1} parent=0 // pred_fallthru
    _
  // Predicated region
  $region10: #{net_forward.1} parent=0 // pred_check
    _
  $region11: #{net_forward.1} parent=0 // pred_check_branch
    %21 = sbr.rel (0) target = $region13
  $region12: #{net_forward.1} parent=0 // pred_region
    _
  $region13: #{net_forward.1} parent=0 // pred_fallthru
    _
  // Predicated region
  $region14: #{net_forward.1} parent=0 // pred_check
    _
  $region15: #{net_forward.1} parent=0 // pred_check_branch
    %23 = sbr.rel (0) target = $region17
  $region16: #{net_forward.1} parent=0 // pred_region
    _
  $region17: #{net_forward.1} parent=0 // pred_fallthru
    _
  // Predicated region
  $region18: #{net_forward.1} parent=0 // pred_check
    _
  $region19: #{net_forward.1} parent=0 // pred_check_branch
    %25 = sbr.rel (0) target = $region21
  $region20: #{net_forward.1} parent=0 // pred_region
    _
  $region21: #{net_forward.1} parent=0 // pred_fallthru
    _
  // Predicated region
  $region22: #{net_forward.1} parent=0 // pred_check
    _
  $region23: #{net_forward.1} parent=0 // pred_check_branch
    %27 = sbr.rel (0) target = $region25
  $region24: #{net_forward.1} parent=0 // pred_region
    _
  $region25: #{net_forward.1} parent=0 // pred_fallthru
    _
  // Predicated region
  $region26: #{net_forward.1} parent=0 // pred_check
    _
  $region27: #{net_forward.1} parent=0 // pred_check_branch
    %29 = sbr.rel (0) target = $region29
  $region28: #{net_forward.1} parent=0 // pred_region
    _
  $region29: #{net_forward.1} parent=0 // pred_fallthru
    _
  // Predicated region
  $region30: #{net_forward.1} parent=0 // pred_check
    _
  $region31: #{net_forward.1} parent=0 // pred_check_branch
    %31 = sbr.rel (0) target = $region33
  $region32: #{net_forward.1} parent=0 // pred_region
    _
  $region33: #{net_forward.1} parent=0 // pred_fallthru
    _
  // Predicated region
  $region34: #{net_forward.1} parent=0 // pred_check
    _
  $region35: #{net_forward.1} parent=0 // pred_check_branch
    %33 = sbr.rel (0) target = $region37
  $region36: #{net_forward.1} parent=0 // pred_region
    _
  $region37: #{net_forward.1} parent=0 // pred_fallthru
    _
  // Predicated region
  $region38: #{net_forward.1} parent=0 // pred_check
    _
  $region39: #{net_forward.1} parent=0 // pred_check_branch
    %35 = sbr.rel (0) target = $region41
  $region40: #{net_forward.1} parent=0 // pred_region
    _
  $region41: #{net_forward.1} parent=0 // pred_fallthru
    _
  // Predicated region
  $region42: #{net_forward.1} parent=0 // pred_check
    _
  $region43: #{net_forward.1} parent=0 // pred_check_branch
    %37 = sbr.rel (0) target = $region45
  $region44: #{net_forward.1} parent=0 // pred_region
    _
  $region45: #{net_forward.1} parent=0 // pred_fallthru
    _
  %v38 = vld [vmem:[%s0] sm:$0xff]
  %v39 = vld [vmem:[%s0 + $0x8] sm:$0xff]
  %v40 = vld [vmem:[%s0 + $0x10] sm:$0xff]
  %v41 = vld [vmem:[%s0 + $0x18] sm:$0xf]
  %v42 = vld [vmem:[%s0 + $0x1c] sm:$0xff]
  %v43 = vld [vmem:[%s0 + $0x24] sm:$0xff]
  %v44 = vld [vmem:[%s0 + $0x2c] sm:$0xff]
  %v45 = vld [vmem:[%s0 + $0x34] sm:$0xf]
  %v46 = vld [vmem:[%s1] sm:$0xff]
  %v47 = vld [vmem:[%s1 + $0x8] sm:$0xff]
  %v48 = vld [vmem:[%s1 + $0x10] sm:$0xff]
  %v49 = vld [vmem:[%s1 + $0x18] sm:$0xff]
  %v50 = vld [vmem:[%s1 + $0x20] sm:$0xff]
  %v51 = vld [vmem:[%s1 + $0x28] sm:$0xff]
  %v52 = vld [vmem:[%s1 + $0x30] sm:$0xff]
  %v53 = vld [vmem:[%s1 + $0x38] sm:$0xff]
  %v54 = vld [vmem:[%s1 + $0x40] sm:$0xff]
  %v55 = vld [vmem:[%s1 + $0x48] sm:$0xff]
  %v56 = vld [vmem:[%s1 + $0x50] sm:$0xff]
  %v57 = vld [vmem:[%s1 + $0x58] sm:$0xff]
  %v58 = vld [vmem:[%s1 + $0x60] sm:$0xff]
  %v59 = vld [vmem:[%s1 + $0x68] sm:$0xff]
  %v60 = vld [vmem:[%s1 + $0x70] sm:$0xff]
  %v61 = vld [vmem:[%s1 + $0x78] sm:$0xff]
  %v62 = vld [vmem:[%s1 + $0x80] sm:$0xff]
  %v63 = vld [vmem:[%s1 + $0x88] sm:$0xff]
  %v64 = vld [vmem:[%s1 + $0x90] sm:$0xff]
  %v65 = vld [vmem:[%s1 + $0x98] sm:$0xff]
  %v66 = vld [vmem:[%s1 + $0xa0] sm:$0xff]
  %v67 = vld [vmem:[%s1 + $0xa8] sm:$0xff]
  %v68 = vld [vmem:[%s1 + $0xb0] sm:$0xff]
  %v69 = vld [vmem:[%s1 + $0xb8] sm:$0xff]
  %v70 = vld [vmem:[%s1 + $0xc0] sm:$0xff]
  %v71 = vld [vmem:[%s1 + $0xc8] sm:$0xff]
  %v72 = vld [vmem:[%s1 + $0xd0] sm:$0xff]
  %v73 = vld [vmem:[%s1 + $0xd8] sm:$0xff]
  %v74 = vld [vmem:[%s1 + $0xe0] sm:$0xff]
  %v75 = vld [vmem:[%s1 + $0xe8] sm:$0xff]
  %v76 = vld [vmem:[%s1 + $0xf0] sm:$0xff]
  %v77 = vld [vmem:[%s1 + $0xf8] sm:$0xff]
  %v78 = vld [vmem:[%s1 + $0x100] sm:$0xff]
  %v79 = vld [vmem:[%s1 + $0x108] sm:$0xff]
  %v80 = vld [vmem:[%s1 + $0x110] sm:$0xff]
  %v81 = vld [vmem:[%s1 + $0x118] sm:$0xff]
  %v82 = vld [vmem:[%s1 + $0x120] sm:$0xff]
  %v83 = vld [vmem:[%s1 + $0x128] sm:$0xff]
  %v84 = vld [vmem:[%s1 + $0x130] sm:$0xff]
  %v85 = vld [vmem:[%s1 + $0x138] sm:$0xff]
  %v86 = vld [vmem:[%s1 + $0x140] sm:$0xff]
  %v87 = vld [vmem:[%s1 + $0x148] sm:$0xff]
  %v88 = vld [vmem:[%s1 + $0x150] sm:$0xff]
  %v89 = vld [vmem:[%s1 + $0x158] sm:$0xff]
  %v90 = vld [vmem:[%s1 + $0x160] sm:$0xff]
  %v91 = vld [vmem:[%s1 + $0x168] sm:$0xff]
  %v92 = vld [vmem:[%s1 + $0x170] sm:$0xff]
  %v93 = vld [vmem:[%s1 + $0x178] sm:$0xff]
  %v94 = vld [vmem:[%s1 + $0x180] sm:$0xff]
  %v95 = vld [vmem:[%s1 + $0x188] sm:$0xff]
  %v96 = vld [vmem:[%s1 + $0x190] sm:$0xff]
  %v97 = vld [vmem:[%s1 + $0x198] sm:$0xff]
  %v98 = vld [vmem:[%s1 + $0x1a0] sm:$0xff]
  %v99 = vld [vmem:[%s1 + $0x1a8] sm:$0xff]
  %v100 = vld [vmem:[%s1 + $0x1b0] sm:$0xff]
  %v101 = vld [vmem:[%s1 + $0x1b8] sm:$0xff]
  %v102 = vld [vmem:[%s1 + $0x1c0] sm:$0xff]
  %v103 = vld [vmem:[%s1 + $0x1c8] sm:$0xff]
  %v104 = vld [vmem:[%s1 + $0x1d0] sm:$0xff]
  %v105 = vld [vmem:[%s1 + $0x1d8] sm:$0xff]
  %v106 = vld [vmem:[%s1 + $0x1e0] sm:$0xff]
  %v107 = vld [vmem:[%s1 + $0x1e8] sm:$0xff]
  %v108 = vld [vmem:[%s1 + $0x1f0] sm:$0xff]
  %v109 = vld [vmem:[%s1 + $0x1f8] sm:$0xff]
  %v110 = vld [vmem:[%s1 + $0x200] sm:$0xff]
  %v111 = vld [vmem:[%s1 + $0x208] sm:$0xff]
  %v112 = vld [vmem:[%s1 + $0x210] sm:$0xff]
  %v113 = vld [vmem:[%s1 + $0x218] sm:$0xff]
  %v114 = vld [vmem:[%s1 + $0x220] sm:$0xff]
  %v115 = vld [vmem:[%s1 + $0x228] sm:$0xff]
  %v116 = vld [vmem:[%s1 + $0x230] sm:$0xff]
  %v117 = vld [vmem:[%s1 + $0x238] sm:$0xff]
  %v118 = vld [vmem:[%s1 + $0x240] sm:$0xff]
  %v119 = vld [vmem:[%s1 + $0x248] sm:$0xff]
  %v120 = vld [vmem:[%s1 + $0x250] sm:$0xff]
  %v121 = vld [vmem:[%s1 + $0x258] sm:$0xff]
  %v122 = vld [vmem:[%s1 + $0x260] sm:$0xff]
  %v123 = vld [vmem:[%s1 + $0x268] sm:$0xff]
  %v124 = vld [vmem:[%s1 + $0x270] sm:$0xff]
  %v125 = vld [vmem:[%s1 + $0x278] sm:$0xff]
  %v126 = vld [vmem:[%s1 + $0x280] sm:$0xff]
  %v127 = vld [vmem:[%s1 + $0x288] sm:$0xff]
  %v128 = vld [vmem:[%s1 + $0x290] sm:$0xff]
  %v129 = vld [vmem:[%s1 + $0x298] sm:$0xff]
  %v130 = vld [vmem:[%s1 + $0x2a0] sm:$0xff]
  %v131 = vld [vmem:[%s1 + $0x2a8] sm:$0xff]
  %v132 = vld [vmem:[%s1 + $0x2b0] sm:$0xff]
  %v133 = vld [vmem:[%s1 + $0x2b8] sm:$0xff]
  %v134 = vld [vmem:[%s1 + $0x2c0] sm:$0xff]
  %v135 = vld [vmem:[%s1 + $0x2c8] sm:$0xff]
  %v136 = vld [vmem:[%s1 + $0x2d0] sm:$0xff]
  %v137 = vld [vmem:[%s1 + $0x2d8] sm:$0xff]
  %v138 = vld [vmem:[%s1 + $0x2e0] sm:$0xff]
  %v139 = vld [vmem:[%s1 + $0x2e8] sm:$0xff]
  %v140 = vld [vmem:[%s1 + $0x2f0] sm:$0xff]
  %v141 = vld [vmem:[%s1 + $0x2f8] sm:$0xff]
  %v142 = vld [vmem:[%s1 + $0x300] sm:$0xff]
  %v143 = vld [vmem:[%s1 + $0x308] sm:$0xff]
  %v144 = vld [vmem:[%s1 + $0x310] sm:$0xff]
  %v145 = vld [vmem:[%s1 + $0x318] sm:$0xff]
  %v146 = vld [vmem:[%s1 + $0x320] sm:$0xff]
  %v147 = vld [vmem:[%s1 + $0x328] sm:$0xff]
  %v148 = vld [vmem:[%s1 + $0x330] sm:$0xff]
  %v149 = vld [vmem:[%s1 + $0x338] sm:$0xff]
  %v150 = vld [vmem:[%s1 + $0x340] sm:$0xff]
  %v151 = vld [vmem:[%s1 + $0x348] sm:$0xff]
  %v152 = vld [vmem:[%s1 + $0x350] sm:$0xff]
  %v153 = vld [vmem:[%s1 + $0x358] sm:$0xff]
  %v154 = vld [vmem:[%s1 + $0x360] sm:$0xff]
  %v155 = vld [vmem:[%s1 + $0x368] sm:$0xff]
  %v156 = vld [vmem:[%s1 + $0x370] sm:$0xff]
  %v157 = vld [vmem:[%s1 + $0x378] sm:$0xff]
  %v158 = vld [vmem:[%s1 + $0x380] sm:$0xff]
  %v159 = vld [vmem:[%s1 + $0x388] sm:$0xff]
  %v160 = vld [vmem:[%s1 + $0x390] sm:$0xff]
  %v161 = vld [vmem:[%s1 + $0x398] sm:$0xff]
  %v162 = vld [vmem:[%s1 + $0x3a0] sm:$0xff]
  %v163 = vld [vmem:[%s1 + $0x3a8] sm:$0xff]
  %v164 = vld [vmem:[%s1 + $0x3b0] sm:$0xff]
  %v165 = vld [vmem:[%s1 + $0x3b8] sm:$0xff]
  %v166 = vld [vmem:[%s1 + $0x3c0] sm:$0xff]
  %v167 = vld [vmem:[%s1 + $0x3c8] sm:$0xff]
  %v168 = vld [vmem:[%s1 + $0x3d0] sm:$0xff]
  %v169 = vld [vmem:[%s1 + $0x3d8] sm:$0xff]
  %v170 = vld [vmem:[%s1 + $0x3e0] sm:$0xff]
  %v171 = vld [vmem:[%s1 + $0x3e8] sm:$0xff]
  %v172 = vld [vmem:[%s1 + $0x3f0] sm:$0xff]
  %v173 = vld [vmem:[%s1 + $0x3f8] sm:$0xff]
  %v174 = vld [vmem:[%s1 + $0x400] sm:$0xff]
  %v175 = vld [vmem:[%s1 + $0x408] sm:$0xff]
  %v176 = vld [vmem:[%s1 + $0x410] sm:$0xff]
  %v177 = vld [vmem:[%s1 + $0x418] sm:$0xff]
  %v178 = vld [vmem:[%s1 + $0x420] sm:$0xff]
  %v179 = vld [vmem:[%s1 + $0x428] sm:$0xff]
  %v180 = vld [vmem:[%s1 + $0x430] sm:$0xff]
  %v181 = vld [vmem:[%s1 + $0x438] sm:$0xff]
  %v182 = vld [vmem:[%s1 + $0x440] sm:$0xff]
  %v183 = vld [vmem:[%s1 + $0x448] sm:$0xff]
  %v184 = vld [vmem:[%s1 + $0x450] sm:$0xff]
  %v185 = vld [vmem:[%s1 + $0x458] sm:$0xff]
  %v186 = vld [vmem:[%s1 + $0x460] sm:$0xff]
  %v187 = vld [vmem:[%s1 + $0x468] sm:$0xff]
  %v188 = vld [vmem:[%s1 + $0x470] sm:$0xff]
  %v189 = vld [vmem:[%s1 + $0x478] sm:$0xff]
  %v190 = vld [vmem:[%s1 + $0x480] sm:$0xff]
  %v191 = vld [vmem:[%s1 + $0x488] sm:$0xff]
  %v192 = vld [vmem:[%s1 + $0x490] sm:$0xff]
  %v193 = vld [vmem:[%s1 + $0x498] sm:$0xff]
  %v194 = vld [vmem:[%s1 + $0x4a0] sm:$0xff]
  %v195 = vld [vmem:[%s1 + $0x4a8] sm:$0xff]
  %v196 = vld [vmem:[%s1 + $0x4b0] sm:$0xff]
  %v197 = vld [vmem:[%s1 + $0x4b8] sm:$0xff]
  %v198 = vld [vmem:[%s1 + $0x4c0] sm:$0xff]
  %v199 = vld [vmem:[%s1 + $0x4c8] sm:$0xff]
  %v200 = vld [vmem:[%s1 + $0x4d0] sm:$0xff]
  %v201 = vld [vmem:[%s1 + $0x4d8] sm:$0xff]
  %v202 = vld [vmem:[%s1 + $0x4e0] sm:$0xff]
  %v203 = vld [vmem:[%s1 + $0x4e8] sm:$0xff]
  %v204 = vld [vmem:[%s1 + $0x4f0] sm:$0xff]
  %v205 = vld [vmem:[%s1 + $0x4f8] sm:$0xff]
  %v206 = vld [vmem:[%s1 + $0x500] sm:$0xff]
  %v207 = vld [vmem:[%s1 + $0x508] sm:$0xff]
  %v208 = vld [vmem:[%s1 + $0x510] sm:$0xff]
  %v209 = vld [vmem:[%s1 + $0x518] sm:$0xff]
  %v210 = vld [vmem:[%s1 + $0x520] sm:$0xff]
  %v211 = vld [vmem:[%s1 + $0x528] sm:$0xff]
  %v212 = vld [vmem:[%s1 + $0x530] sm:$0xff]
  %v213 = vld [vmem:[%s1 + $0x538] sm:$0xff]
  %v214 = vld [vmem:[%s1 + $0x540] sm:$0xff]
  %v215 = vld [vmem:[%s1 + $0x548] sm:$0xff]
  %v216 = vld [vmem:[%s1 + $0x550] sm:$0xff]
  %v217 = vld [vmem:[%s1 + $0x558] sm:$0xff]
  %v218 = vld [vmem:[%s1 + $0x560] sm:$0xff]
  %v219 = vld [vmem:[%s1 + $0x568] sm:$0xff]
  %v220 = vld [vmem:[%s1 + $0x570] sm:$0xff]
  %v221 = vld [vmem:[%s1 + $0x578] sm:$0xff]
  %v222 = vld [vmem:[%s1 + $0x580] sm:$0xff]
  %v223 = vld [vmem:[%s1 + $0x588] sm:$0xff]
  %v224 = vld [vmem:[%s1 + $0x590] sm:$0xff]
  %v225 = vld [vmem:[%s1 + $0x598] sm:$0xff]
  %v226 = vld [vmem:[%s1 + $0x5a0] sm:$0xff]
  %v227 = vld [vmem:[%s1 + $0x5a8] sm:$0xff]
  %v228 = vld [vmem:[%s1 + $0x5b0] sm:$0xff]
  %v229 = vld [vmem:[%s1 + $0x5b8] sm:$0xff]
  %v230 = vld [vmem:[%s1 + $0x5c0] sm:$0xff]
  %v231 = vld [vmem:[%s1 + $0x5c8] sm:$0xff]
  %v232 = vld [vmem:[%s1 + $0x5d0] sm:$0xff]
  %v233 = vld [vmem:[%s1 + $0x5d8] sm:$0xff]
  %v234 = vld [vmem:[%s1 + $0x5e0] sm:$0xff]
  %v235 = vld [vmem:[%s1 + $0x5e8] sm:$0xff]
  %v236 = vld [vmem:[%s1 + $0x5f0] sm:$0xff]
  %v237 = vld [vmem:[%s1 + $0x5f8] sm:$0xff]
  %v238 = vld [vmem:[%s1 + $0x600] sm:$0xff]
  %v239 = vld [vmem:[%s1 + $0x608] sm:$0xff]
  %v240 = vld [vmem:[%s1 + $0x610] sm:$0xff]
  %v241 = vld [vmem:[%s1 + $0x618] sm:$0xff]
  %v242 = vld [vmem:[%s1 + $0x620] sm:$0xff]
  %v243 = vld [vmem:[%s1 + $0x628] sm:$0xff]
  %v244 = vld [vmem:[%s1 + $0x630] sm:$0xff]
  %v245 = vld [vmem:[%s1 + $0x638] sm:$0xff]
  %v246 = vld [vmem:[%s1 + $0x640] sm:$0xff]
  %v247 = vld [vmem:[%s1 + $0x648] sm:$0xff]
  %v248 = vld [vmem:[%s1 + $0x650] sm:$0xff]
  %v249 = vld [vmem:[%s1 + $0x658] sm:$0xff]
  %v250 = vld [vmem:[%s1 + $0x660] sm:$0xff]
  %v251 = vld [vmem:[%s1 + $0x668] sm:$0xff]
  %v252 = vld [vmem:[%s1 + $0x670] sm:$0xff]
  %v253 = vld [vmem:[%s1 + $0x678] sm:$0xff]
  %v254 = vld [vmem:[%s1 + $0x680] sm:$0xff]
  %v255 = vld [vmem:[%s1 + $0x688] sm:$0xff]
  %v256 = vld [vmem:[%s1 + $0x690] sm:$0xff]
  %v257 = vld [vmem:[%s1 + $0x698] sm:$0xff]
  %v258 = vld [vmem:[%s1 + $0x6a0] sm:$0xff]
  %v259 = vld [vmem:[%s1 + $0x6a8] sm:$0xff]
  %v260 = vld [vmem:[%s1 + $0x6b0] sm:$0xff]
  %v261 = vld [vmem:[%s1 + $0x6b8] sm:$0xff]
  %v262 = vld [vmem:[%s1 + $0x6c0] sm:$0xff]
  %v263 = vld [vmem:[%s1 + $0x6c8] sm:$0xff]
  %v264 = vld [vmem:[%s1 + $0x6d0] sm:$0xff]
  %v265 = vld [vmem:[%s1 + $0x6d8] sm:$0xff]
  %v266 = vld [vmem:[%s1 + $0x6e0] sm:$0xff]
  %v267 = vld [vmem:[%s1 + $0x6e8] sm:$0xff]
  %v268 = vld [vmem:[%s1 + $0x6f0] sm:$0xff]
  %v269 = vld [vmem:[%s1 + $0x6f8] sm:$0xff]
  %v270 = vld [vmem:[%s2] sm:$0xf]
  %v272 = vperm.slane %v270, 0
  %v273 = vperm.slane %v270, 1
  %v274 = vperm.slane %v270, 2
  %v275 = vperm.slane %v270, 3
  %v288 = vunpack.c.l.b16 %v38
  %v289 = vunpack.c.h.b16 %v38
  %v290 = vunpack.c.l.b16 %v39
  %v291 = vunpack.c.h.b16 %v39
  %v292 = vunpack.c.l.b16 %v40
  %v293 = vunpack.c.h.b16 %v40
  %v294 = vunpack.c.l.b16 %v41
  %v295 = vunpack.c.l.b16 %v42
  %v296 = vunpack.c.h.b16 %v42
  %v297 = vunpack.c.l.b16 %v43
  %v298 = vunpack.c.h.b16 %v43
  %v299 = vunpack.c.l.b16 %v44
  %v300 = vunpack.c.h.b16 %v44
  %v301 = vunpack.c.l.b16 %v45
  %v302 = vpack.c.b16 %v295, %v288
  %v303 = vpack.c.b16 %v296, %v289
  %v304 = vpack.c.b16 %v297, %v290
  %v305 = vpack.c.b16 %v298, %v291
  %v306 = vpack.c.b16 %v299, %v292
  %v307 = vpack.c.b16 %v300, %v293
  %v308 = vpack.c.b16 %v301, %v294
  %v540 = vunpack.c.l.b16 %v46
  %v541 = vunpack.c.h.b16 %v46
  %v542 = vunpack.c.l.b16 %v47
  %v543 = vunpack.c.h.b16 %v47
  %v544 = vunpack.c.l.b16 %v48
  %v545 = vunpack.c.h.b16 %v48
  %v546 = vunpack.c.l.b16 %v49
  %v547 = vunpack.c.h.b16 %v49
  %v548 = vunpack.c.l.b16 %v50
  %v549 = vunpack.c.h.b16 %v50
  %v550 = vunpack.c.l.b16 %v51
  %v551 = vunpack.c.h.b16 %v51
  %v552 = vunpack.c.l.b16 %v52
  %v553 = vunpack.c.h.b16 %v52
  %v554 = vunpack.c.l.b16 %v53
  %v555 = vunpack.c.h.b16 %v53
  %v556 = vunpack.c.l.b16 %v54
  %v557 = vunpack.c.h.b16 %v54
  %v558 = vunpack.c.l.b16 %v55
  %v559 = vunpack.c.h.b16 %v55
  %v560 = vunpack.c.l.b16 %v56
  %v561 = vunpack.c.h.b16 %v56
  %v562 = vunpack.c.l.b16 %v57
  %v563 = vunpack.c.h.b16 %v57
  %v564 = vunpack.c.l.b16 %v58
  %v565 = vunpack.c.h.b16 %v58
  %v566 = vunpack.c.l.b16 %v59
  %v567 = vunpack.c.h.b16 %v59
  %v568 = vunpack.c.l.b16 %v60
  %v569 = vunpack.c.h.b16 %v60
  %v570 = vunpack.c.l.b16 %v61
  %v571 = vunpack.c.h.b16 %v61
  %v572 = vunpack.c.l.b16 %v62
  %v573 = vunpack.c.h.b16 %v62
  %v574 = vunpack.c.l.b16 %v63
  %v575 = vunpack.c.h.b16 %v63
  %v576 = vunpack.c.l.b16 %v64
  %v577 = vunpack.c.h.b16 %v64
  %v578 = vunpack.c.l.b16 %v65
  %v579 = vunpack.c.h.b16 %v65
  %v580 = vunpack.c.l.b16 %v66
  %v581 = vunpack.c.h.b16 %v66
  %v582 = vunpack.c.l.b16 %v67
  %v583 = vunpack.c.h.b16 %v67
  %v584 = vunpack.c.l.b16 %v68
  %v585 = vunpack.c.h.b16 %v68
  %v586 = vunpack.c.l.b16 %v69
  %v587 = vunpack.c.h.b16 %v69
  %v588 = vunpack.c.l.b16 %v70
  %v589 = vunpack.c.h.b16 %v70
  %v590 = vunpack.c.l.b16 %v71
  %v591 = vunpack.c.h.b16 %v71
  %v592 = vunpack.c.l.b16 %v72
  %v593 = vunpack.c.h.b16 %v72
  %v594 = vunpack.c.l.b16 %v73
  %v595 = vunpack.c.h.b16 %v73
  %v596 = vunpack.c.l.b16 %v74
  %v597 = vunpack.c.h.b16 %v74
  %v598 = vunpack.c.l.b16 %v75
  %v599 = vunpack.c.h.b16 %v75
  %v600 = vunpack.c.l.b16 %v76
  %v601 = vunpack.c.h.b16 %v76
  %v602 = vunpack.c.l.b16 %v77
  %v603 = vunpack.c.h.b16 %v77
  %v604 = vunpack.c.l.b16 %v78
  %v605 = vunpack.c.h.b16 %v78
  %v606 = vunpack.c.l.b16 %v79
  %v607 = vunpack.c.h.b16 %v79
  %v608 = vunpack.c.l.b16 %v80
  %v609 = vunpack.c.h.b16 %v80
  %v610 = vunpack.c.l.b16 %v81
  %v611 = vunpack.c.h.b16 %v81
  %v612 = vunpack.c.l.b16 %v82
  %v613 = vunpack.c.h.b16 %v82
  %v614 = vunpack.c.l.b16 %v83
  %v615 = vunpack.c.h.b16 %v83
  %v616 = vunpack.c.l.b16 %v84
  %v617 = vunpack.c.h.b16 %v84
  %v618 = vunpack.c.l.b16 %v85
  %v619 = vunpack.c.h.b16 %v85
  %v620 = vunpack.c.l.b16 %v86
  %v621 = vunpack.c.h.b16 %v86
  %v622 = vunpack.c.l.b16 %v87
  %v623 = vunpack.c.h.b16 %v87
  %v624 = vunpack.c.l.b16 %v88
  %v625 = vunpack.c.h.b16 %v88
  %v626 = vunpack.c.l.b16 %v89
  %v627 = vunpack.c.h.b16 %v89
  %v628 = vunpack.c.l.b16 %v90
  %v629 = vunpack.c.h.b16 %v90
  %v630 = vunpack.c.l.b16 %v91
  %v631 = vunpack.c.h.b16 %v91
  %v632 = vunpack.c.l.b16 %v92
  %v633 = vunpack.c.h.b16 %v92
  %v634 = vunpack.c.l.b16 %v93
  %v635 = vunpack.c.h.b16 %v93
  %v636 = vunpack.c.l.b16 %v94
  %v637 = vunpack.c.h.b16 %v94
  %v638 = vunpack.c.l.b16 %v95
  %v639 = vunpack.c.h.b16 %v95
  %v640 = vunpack.c.l.b16 %v96
  %v641 = vunpack.c.h.b16 %v96
  %v642 = vunpack.c.l.b16 %v97
  %v643 = vunpack.c.h.b16 %v97
  %v644 = vunpack.c.l.b16 %v98
  %v645 = vunpack.c.h.b16 %v98
  %v646 = vunpack.c.l.b16 %v99
  %v647 = vunpack.c.h.b16 %v99
  %v648 = vunpack.c.l.b16 %v100
  %v649 = vunpack.c.h.b16 %v100
  %v650 = vunpack.c.l.b16 %v101
  %v651 = vunpack.c.h.b16 %v101
  %v652 = vunpack.c.l.b16 %v102
  %v653 = vunpack.c.h.b16 %v102
  %v654 = vunpack.c.l.b16 %v103
  %v655 = vunpack.c.h.b16 %v103
  %v656 = vunpack.c.l.b16 %v104
  %v657 = vunpack.c.h.b16 %v104
  %v658 = vunpack.c.l.b16 %v105
  %v659 = vunpack.c.h.b16 %v105
  %v660 = vunpack.c.l.b16 %v106
  %v661 = vunpack.c.h.b16 %v106
  %v662 = vunpack.c.l.b16 %v107
  %v663 = vunpack.c.h.b16 %v107
  %v664 = vunpack.c.l.b16 %v108
  %v665 = vunpack.c.h.b16 %v108
  %v666 = vunpack.c.l.b16 %v109
  %v667 = vunpack.c.h.b16 %v109
  %v668 = vunpack.c.l.b16 %v110
  %v669 = vunpack.c.h.b16 %v110
  %v670 = vunpack.c.l.b16 %v111
  %v671 = vunpack.c.h.b16 %v111
  %v672 = vunpack.c.l.b16 %v112
  %v673 = vunpack.c.h.b16 %v112
  %v674 = vunpack.c.l.b16 %v113
  %v675 = vunpack.c.h.b16 %v113
  %v676 = vunpack.c.l.b16 %v114
  %v677 = vunpack.c.h.b16 %v114
  %v678 = vunpack.c.l.b16 %v115
  %v679 = vunpack.c.h.b16 %v115
  %v680 = vunpack.c.l.b16 %v116
  %v681 = vunpack.c.h.b16 %v116
  %v682 = vunpack.c.l.b16 %v117
  %v683 = vunpack.c.h.b16 %v117
  %v684 = vunpack.c.l.b16 %v118
  %v685 = vunpack.c.h.b16 %v118
  %v686 = vunpack.c.l.b16 %v119
  %v687 = vunpack.c.h.b16 %v119
  %v688 = vunpack.c.l.b16 %v120
  %v689 = vunpack.c.h.b16 %v120
  %v690 = vunpack.c.l.b16 %v121
  %v691 = vunpack.c.h.b16 %v121
  %v692 = vunpack.c.l.b16 %v122
  %v693 = vunpack.c.h.b16 %v122
  %v694 = vunpack.c.l.b16 %v123
  %v695 = vunpack.c.h.b16 %v123
  %v696 = vunpack.c.l.b16 %v124
  %v697 = vunpack.c.h.b16 %v124
  %v698 = vunpack.c.l.b16 %v125
  %v699 = vunpack.c.h.b16 %v125
  %v700 = vunpack.c.l.b16 %v126
  %v701 = vunpack.c.h.b16 %v126
  %v702 = vunpack.c.l.b16 %v127
  %v703 = vunpack.c.h.b16 %v127
  %v704 = vunpack.c.l.b16 %v128
  %v705 = vunpack.c.h.b16 %v128
  %v706 = vunpack.c.l.b16 %v129
  %v707 = vunpack.c.h.b16 %v129
  %v708 = vunpack.c.l.b16 %v130
  %v709 = vunpack.c.h.b16 %v130
  %v710 = vunpack.c.l.b16 %v131
  %v711 = vunpack.c.h.b16 %v131
  %v712 = vunpack.c.l.b16 %v132
  %v713 = vunpack.c.h.b16 %v132
  %v714 = vunpack.c.l.b16 %v133
  %v715 = vunpack.c.h.b16 %v133
  %v716 = vunpack.c.l.b16 %v134
  %v717 = vunpack.c.h.b16 %v134
  %v718 = vunpack.c.l.b16 %v135
  %v719 = vunpack.c.h.b16 %v135
  %v720 = vunpack.c.l.b16 %v136
  %v721 = vunpack.c.h.b16 %v136
  %v722 = vunpack.c.l.b16 %v137
  %v723 = vunpack.c.h.b16 %v137
  %v724 = vunpack.c.l.b16 %v138
  %v725 = vunpack.c.h.b16 %v138
  %v726 = vunpack.c.l.b16 %v139
  %v727 = vunpack.c.h.b16 %v139
  %v728 = vunpack.c.l.b16 %v140
  %v729 = vunpack.c.h.b16 %v140
  %v730 = vunpack.c.l.b16 %v141
  %v731 = vunpack.c.h.b16 %v141
  %v732 = vunpack.c.l.b16 %v142
  %v733 = vunpack.c.h.b16 %v142
  %v734 = vunpack.c.l.b16 %v143
  %v735 = vunpack.c.h.b16 %v143
  %v736 = vunpack.c.l.b16 %v144
  %v737 = vunpack.c.h.b16 %v144
  %v738 = vunpack.c.l.b16 %v145
  %v739 = vunpack.c.h.b16 %v145
  %v740 = vunpack.c.l.b16 %v146
  %v741 = vunpack.c.h.b16 %v146
  %v742 = vunpack.c.l.b16 %v147
  %v743 = vunpack.c.h.b16 %v147
  %v744 = vunpack.c.l.b16 %v148
  %v745 = vunpack.c.h.b16 %v148
  %v746 = vunpack.c.l.b16 %v149
  %v747 = vunpack.c.h.b16 %v149
  %v748 = vunpack.c.l.b16 %v150
  %v749 = vunpack.c.h.b16 %v150
  %v750 = vunpack.c.l.b16 %v151
  %v751 = vunpack.c.h.b16 %v151
  %v752 = vunpack.c.l.b16 %v152
  %v753 = vunpack.c.h.b16 %v152
  %v754 = vunpack.c.l.b16 %v153
  %v755 = vunpack.c.h.b16 %v153
  %v756 = vunpack.c.l.b16 %v154
  %v757 = vunpack.c.h.b16 %v154
  %v758 = vunpack.c.l.b16 %v155
  %v759 = vunpack.c.h.b16 %v155
  %v760 = vunpack.c.l.b16 %v156
  %v761 = vunpack.c.h.b16 %v156
  %v762 = vunpack.c.l.b16 %v157
  %v763 = vunpack.c.h.b16 %v157
  %v764 = vunpack.c.l.b16 %v158
  %v765 = vunpack.c.h.b16 %v158
  %v766 = vunpack.c.l.b16 %v159
  %v767 = vunpack.c.h.b16 %v159
  %v768 = vunpack.c.l.b16 %v160
  %v769 = vunpack.c.h.b16 %v160
  %v770 = vunpack.c.l.b16 %v161
  %v771 = vunpack.c.h.b16 %v161
  %v772 = vunpack.c.l.b16 %v162
  %v773 = vunpack.c.h.b16 %v162
  %v774 = vunpack.c.l.b16 %v163
  %v775 = vunpack.c.h.b16 %v163
  %v776 = vunpack.c.l.b16 %v164
  %v777 = vunpack.c.h.b16 %v164
  %v778 = vunpack.c.l.b16 %v165
  %v779 = vunpack.c.h.b16 %v165
  %v780 = vunpack.c.l.b16 %v166
  %v781 = vunpack.c.h.b16 %v166
  %v782 = vunpack.c.l.b16 %v167
  %v783 = vunpack.c.h.b16 %v167
  %v784 = vunpack.c.l.b16 %v168
  %v785 = vunpack.c.h.b16 %v168
  %v786 = vunpack.c.l.b16 %v169
  %v787 = vunpack.c.h.b16 %v169
  %v788 = vunpack.c.l.b16 %v170
  %v789 = vunpack.c.h.b16 %v170
  %v790 = vunpack.c.l.b16 %v171
  %v791 = vunpack.c.h.b16 %v171
  %v792 = vunpack.c.l.b16 %v172
  %v793 = vunpack.c.h.b16 %v172
  %v794 = vunpack.c.l.b16 %v173
  %v795 = vunpack.c.h.b16 %v173
  %v796 = vunpack.c.l.b16 %v174
  %v797 = vunpack.c.h.b16 %v174
  %v798 = vunpack.c.l.b16 %v175
  %v799 = vunpack.c.h.b16 %v175
  %v800 = vunpack.c.l.b16 %v176
  %v801 = vunpack.c.h.b16 %v176
  %v802 = vunpack.c.l.b16 %v177
  %v803 = vunpack.c.h.b16 %v177
  %v804 = vunpack.c.l.b16 %v178
  %v805 = vunpack.c.h.b16 %v178
  %v806 = vunpack.c.l.b16 %v179
  %v807 = vunpack.c.h.b16 %v179
  %v808 = vunpack.c.l.b16 %v180
  %v809 = vunpack.c.h.b16 %v180
  %v810 = vunpack.c.l.b16 %v181
  %v811 = vunpack.c.h.b16 %v181
  %v812 = vunpack.c.l.b16 %v182
  %v813 = vunpack.c.h.b16 %v182
  %v814 = vunpack.c.l.b16 %v183
  %v815 = vunpack.c.h.b16 %v183
  %v816 = vunpack.c.l.b16 %v184
  %v817 = vunpack.c.h.b16 %v184
  %v818 = vunpack.c.l.b16 %v185
  %v819 = vunpack.c.h.b16 %v185
  %v820 = vunpack.c.l.b16 %v186
  %v821 = vunpack.c.h.b16 %v186
  %v822 = vunpack.c.l.b16 %v187
  %v823 = vunpack.c.h.b16 %v187
  %v824 = vunpack.c.l.b16 %v188
  %v825 = vunpack.c.h.b16 %v188
  %v826 = vunpack.c.l.b16 %v189
  %v827 = vunpack.c.h.b16 %v189
  %v828 = vunpack.c.l.b16 %v190
  %v829 = vunpack.c.h.b16 %v190
  %v830 = vunpack.c.l.b16 %v191
  %v831 = vunpack.c.h.b16 %v191
  %v832 = vunpack.c.l.b16 %v192
  %v833 = vunpack.c.h.b16 %v192
  %v834 = vunpack.c.l.b16 %v193
  %v835 = vunpack.c.h.b16 %v193
  %v836 = vunpack.c.l.b16 %v194
  %v837 = vunpack.c.h.b16 %v194
  %v838 = vunpack.c.l.b16 %v195
  %v839 = vunpack.c.h.b16 %v195
  %v840 = vunpack.c.l.b16 %v196
  %v841 = vunpack.c.h.b16 %v196
  %v842 = vunpack.c.l.b16 %v197
  %v843 = vunpack.c.h.b16 %v197
  %v844 = vunpack.c.l.b16 %v198
  %v845 = vunpack.c.h.b16 %v198
  %v846 = vunpack.c.l.b16 %v199
  %v847 = vunpack.c.h.b16 %v199
  %v848 = vunpack.c.l.b16 %v200
  %v849 = vunpack.c.h.b16 %v200
  %v850 = vunpack.c.l.b16 %v201
  %v851 = vunpack.c.h.b16 %v201
  %v852 = vunpack.c.l.b16 %v202
  %v853 = vunpack.c.h.b16 %v202
  %v854 = vunpack.c.l.b16 %v203
  %v855 = vunpack.c.h.b16 %v203
  %v856 = vunpack.c.l.b16 %v204
  %v857 = vunpack.c.h.b16 %v204
  %v858 = vunpack.c.l.b16 %v205
  %v859 = vunpack.c.h.b16 %v205
  %v860 = vunpack.c.l.b16 %v206
  %v861 = vunpack.c.h.b16 %v206
  %v862 = vunpack.c.l.b16 %v207
  %v863 = vunpack.c.h.b16 %v207
  %v864 = vunpack.c.l.b16 %v208
  %v865 = vunpack.c.h.b16 %v208
  %v866 = vunpack.c.l.b16 %v209
  %v867 = vunpack.c.h.b16 %v209
  %v868 = vunpack.c.l.b16 %v210
  %v869 = vunpack.c.h.b16 %v210
  %v870 = vunpack.c.l.b16 %v211
  %v871 = vunpack.c.h.b16 %v211
  %v872 = vunpack.c.l.b16 %v212
  %v873 = vunpack.c.h.b16 %v212
  %v874 = vunpack.c.l.b16 %v213
  %v875 = vunpack.c.h.b16 %v213
  %v876 = vunpack.c.l.b16 %v214
  %v877 = vunpack.c.h.b16 %v214
  %v878 = vunpack.c.l.b16 %v215
  %v879 = vunpack.c.h.b16 %v215
  %v880 = vunpack.c.l.b16 %v216
  %v881 = vunpack.c.h.b16 %v216
  %v882 = vunpack.c.l.b16 %v217
  %v883 = vunpack.c.h.b16 %v217
  %v884 = vunpack.c.l.b16 %v218
  %v885 = vunpack.c.h.b16 %v218
  %v886 = vunpack.c.l.b16 %v219
  %v887 = vunpack.c.h.b16 %v219
  %v888 = vunpack.c.l.b16 %v220
  %v889 = vunpack.c.h.b16 %v220
  %v890 = vunpack.c.l.b16 %v221
  %v891 = vunpack.c.h.b16 %v221
  %v892 = vunpack.c.l.b16 %v222
  %v893 = vunpack.c.h.b16 %v222
  %v894 = vunpack.c.l.b16 %v223
  %v895 = vunpack.c.h.b16 %v223
  %v896 = vunpack.c.l.b16 %v224
  %v897 = vunpack.c.h.b16 %v224
  %v898 = vunpack.c.l.b16 %v225
  %v899 = vunpack.c.h.b16 %v225
  %v900 = vunpack.c.l.b16 %v226
  %v901 = vunpack.c.h.b16 %v226
  %v902 = vunpack.c.l.b16 %v227
  %v903 = vunpack.c.h.b16 %v227
  %v904 = vunpack.c.l.b16 %v228
  %v905 = vunpack.c.h.b16 %v228
  %v906 = vunpack.c.l.b16 %v229
  %v907 = vunpack.c.h.b16 %v229
  %v908 = vunpack.c.l.b16 %v230
  %v909 = vunpack.c.h.b16 %v230
  %v910 = vunpack.c.l.b16 %v231
  %v911 = vunpack.c.h.b16 %v231
  %v912 = vunpack.c.l.b16 %v232
  %v913 = vunpack.c.h.b16 %v232
  %v914 = vunpack.c.l.b16 %v233
  %v915 = vunpack.c.h.b16 %v233
  %v916 = vunpack.c.l.b16 %v234
  %v917 = vunpack.c.h.b16 %v234
  %v918 = vunpack.c.l.b16 %v235
  %v919 = vunpack.c.h.b16 %v235
  %v920 = vunpack.c.l.b16 %v236
  %v921 = vunpack.c.h.b16 %v236
  %v922 = vunpack.c.l.b16 %v237
  %v923 = vunpack.c.h.b16 %v237
  %v924 = vunpack.c.l.b16 %v238
  %v925 = vunpack.c.h.b16 %v238
  %v926 = vunpack.c.l.b16 %v239
  %v927 = vunpack.c.h.b16 %v239
  %v928 = vunpack.c.l.b16 %v240
  %v929 = vunpack.c.h.b16 %v240
  %v930 = vunpack.c.l.b16 %v241
  %v931 = vunpack.c.h.b16 %v241
  %v932 = vunpack.c.l.b16 %v242
  %v933 = vunpack.c.h.b16 %v242
  %v934 = vunpack.c.l.b16 %v243
  %v935 = vunpack.c.h.b16 %v243
  %v936 = vunpack.c.l.b16 %v244
  %v937 = vunpack.c.h.b16 %v244
  %v938 = vunpack.c.l.b16 %v245
  %v939 = vunpack.c.h.b16 %v245
  %v940 = vunpack.c.l.b16 %v246
  %v941 = vunpack.c.h.b16 %v246
  %v942 = vunpack.c.l.b16 %v247
  %v943 = vunpack.c.h.b16 %v247
  %v944 = vunpack.c.l.b16 %v248
  %v945 = vunpack.c.h.b16 %v248
  %v946 = vunpack.c.l.b16 %v249
  %v947 = vunpack.c.h.b16 %v249
  %v948 = vunpack.c.l.b16 %v250
  %v949 = vunpack.c.h.b16 %v250
  %v950 = vunpack.c.l.b16 %v251
  %v951 = vunpack.c.h.b16 %v251
  %v952 = vunpack.c.l.b16 %v252
  %v953 = vunpack.c.h.b16 %v252
  %v954 = vunpack.c.l.b16 %v253
  %v955 = vunpack.c.h.b16 %v253
  %v956 = vunpack.c.l.b16 %v254
  %v957 = vunpack.c.h.b16 %v254
  %v958 = vunpack.c.l.b16 %v255
  %v959 = vunpack.c.h.b16 %v255
  %v960 = vunpack.c.l.b16 %v256
  %v961 = vunpack.c.h.b16 %v256
  %v962 = vunpack.c.l.b16 %v257
  %v963 = vunpack.c.h.b16 %v257
  %v964 = vunpack.c.l.b16 %v258
  %v965 = vunpack.c.h.b16 %v258
  %v966 = vunpack.c.l.b16 %v259
  %v967 = vunpack.c.h.b16 %v259
  %v968 = vunpack.c.l.b16 %v260
  %v969 = vunpack.c.h.b16 %v260
  %v970 = vunpack.c.l.b16 %v261
  %v971 = vunpack.c.h.b16 %v261
  %v972 = vunpack.c.l.b16 %v262
  %v973 = vunpack.c.h.b16 %v262
  %v974 = vunpack.c.l.b16 %v263
  %v975 = vunpack.c.h.b16 %v263
  %v976 = vunpack.c.l.b16 %v264
  %v977 = vunpack.c.h.b16 %v264
  %v978 = vunpack.c.l.b16 %v265
  %v979 = vunpack.c.h.b16 %v265
  %v980 = vunpack.c.l.b16 %v266
  %v981 = vunpack.c.h.b16 %v266
  %v982 = vunpack.c.l.b16 %v267
  %v983 = vunpack.c.h.b16 %v267
  %v984 = vunpack.c.l.b16 %v268
  %v985 = vunpack.c.h.b16 %v268
  %v986 = vunpack.c.l.b16 %v269
  %v987 = vunpack.c.h.b16 %v269
  %v988 = vpack.c.b16 %v544, %v540
  %v989 = vpack.c.b16 %v545, %v541
  %v990 = vpack.c.b16 %v546, %v542
  %v991 = vpack.c.b16 %v547, %v543
  %v992 = vpack.c.b16 %v552, %v548
  %v993 = vpack.c.b16 %v553, %v549
  %v994 = vpack.c.b16 %v554, %v550
  %v995 = vpack.c.b16 %v555, %v551
  %v996 = vpack.c.b16 %v560, %v556
  %v997 = vpack.c.b16 %v561, %v557
  %v998 = vpack.c.b16 %v562, %v558
  %v999 = vpack.c.b16 %v563, %v559
  %v1000 = vpack.c.b16 %v568, %v564
  %v1001 = vpack.c.b16 %v569, %v565
  %v1002 = vpack.c.b16 %v570, %v566
  %v1003 = vpack.c.b16 %v571, %v567
  %v1004 = vpack.c.b16 %v576, %v572
  %v1005 = vpack.c.b16 %v577, %v573
  %v1006 = vpack.c.b16 %v578, %v574
  %v1007 = vpack.c.b16 %v579, %v575
  %v1008 = vpack.c.b16 %v584, %v580
  %v1009 = vpack.c.b16 %v585, %v581
  %v1010 = vpack.c.b16 %v586, %v582
  %v1011 = vpack.c.b16 %v587, %v583
  %v1012 = vpack.c.b16 %v592, %v588
  %v1013 = vpack.c.b16 %v593, %v589
  %v1014 = vpack.c.b16 %v594, %v590
  %v1015 = vpack.c.b16 %v595, %v591
  %v1016 = vpack.c.b16 %v600, %v596
  %v1017 = vpack.c.b16 %v601, %v597
  %v1018 = vpack.c.b16 %v602, %v598
  %v1019 = vpack.c.b16 %v603, %v599
  %v1020 = vpack.c.b16 %v608, %v604
  %v1021 = vpack.c.b16 %v609, %v605
  %v1022 = vpack.c.b16 %v610, %v606
  %v1023 = vpack.c.b16 %v611, %v607
  %v1024 = vpack.c.b16 %v616, %v612
  %v1025 = vpack.c.b16 %v617, %v613
  %v1026 = vpack.c.b16 %v618, %v614
  %v1027 = vpack.c.b16 %v619, %v615
  %v1028 = vpack.c.b16 %v624, %v620
  %v1029 = vpack.c.b16 %v625, %v621
  %v1030 = vpack.c.b16 %v626, %v622
  %v1031 = vpack.c.b16 %v627, %v623
  %v1032 = vpack.c.b16 %v632, %v628
  %v1033 = vpack.c.b16 %v633, %v629
  %v1034 = vpack.c.b16 %v634, %v630
  %v1035 = vpack.c.b16 %v635, %v631
  %v1036 = vpack.c.b16 %v640, %v636
  %v1037 = vpack.c.b16 %v641, %v637
  %v1038 = vpack.c.b16 %v642, %v638
  %v1039 = vpack.c.b16 %v643, %v639
  %v1040 = vpack.c.b16 %v648, %v644
  %v1041 = vpack.c.b16 %v649, %v645
  %v1042 = vpack.c.b16 %v650, %v646
  %v1043 = vpack.c.b16 %v651, %v647
  %v1044 = vpack.c.b16 %v656, %v652
  %v1045 = vpack.c.b16 %v657, %v653
  %v1046 = vpack.c.b16 %v658, %v654
  %v1047 = vpack.c.b16 %v659, %v655
  %v1048 = vpack.c.b16 %v664, %v660
  %v1049 = vpack.c.b16 %v665, %v661
  %v1050 = vpack.c.b16 %v666, %v662
  %v1051 = vpack.c.b16 %v667, %v663
  %v1052 = vpack.c.b16 %v672, %v668
  %v1053 = vpack.c.b16 %v673, %v669
  %v1054 = vpack.c.b16 %v674, %v670
  %v1055 = vpack.c.b16 %v675, %v671
  %v1056 = vpack.c.b16 %v680, %v676
  %v1057 = vpack.c.b16 %v681, %v677
  %v1058 = vpack.c.b16 %v682, %v678
  %v1059 = vpack.c.b16 %v683, %v679
  %v1060 = vpack.c.b16 %v688, %v684
  %v1061 = vpack.c.b16 %v689, %v685
  %v1062 = vpack.c.b16 %v690, %v686
  %v1063 = vpack.c.b16 %v691, %v687
  %v1064 = vpack.c.b16 %v696, %v692
  %v1065 = vpack.c.b16 %v697, %v693
  %v1066 = vpack.c.b16 %v698, %v694
  %v1067 = vpack.c.b16 %v699, %v695
  %v1068 = vpack.c.b16 %v704, %v700
  %v1069 = vpack.c.b16 %v705, %v701
  %v1070 = vpack.c.b16 %v706, %v702
  %v1071 = vpack.c.b16 %v707, %v703
  %v1072 = vpack.c.b16 %v712, %v708
  %v1073 = vpack.c.b16 %v713, %v709
  %v1074 = vpack.c.b16 %v714, %v710
  %v1075 = vpack.c.b16 %v715, %v711
  %v1076 = vpack.c.b16 %v720, %v716
  %v1077 = vpack.c.b16 %v721, %v717
  %v1078 = vpack.c.b16 %v722, %v718
  %v1079 = vpack.c.b16 %v723, %v719
  %v1080 = vpack.c.b16 %v728, %v724
  %v1081 = vpack.c.b16 %v729, %v725
  %v1082 = vpack.c.b16 %v730, %v726
  %v1083 = vpack.c.b16 %v731, %v727
  %v1084 = vpack.c.b16 %v736, %v732
  %v1085 = vpack.c.b16 %v737, %v733
  %v1086 = vpack.c.b16 %v738, %v734
  %v1087 = vpack.c.b16 %v739, %v735
  %v1088 = vpack.c.b16 %v744, %v740
  %v1089 = vpack.c.b16 %v745, %v741
  %v1090 = vpack.c.b16 %v746, %v742
  %v1091 = vpack.c.b16 %v747, %v743
  %v1092 = vpack.c.b16 %v752, %v748
  %v1093 = vpack.c.b16 %v753, %v749
  %v1094 = vpack.c.b16 %v754, %v750
  %v1095 = vpack.c.b16 %v755, %v751
  %v1096 = vpack.c.b16 %v760, %v756
  %v1097 = vpack.c.b16 %v761, %v757
  %v1098 = vpack.c.b16 %v762, %v758
  %v1099 = vpack.c.b16 %v763, %v759
  %v1100 = vpack.c.b16 %v768, %v764
  %v1101 = vpack.c.b16 %v769, %v765
  %v1102 = vpack.c.b16 %v770, %v766
  %v1103 = vpack.c.b16 %v771, %v767
  %v1104 = vpack.c.b16 %v776, %v772
  %v1105 = vpack.c.b16 %v777, %v773
  %v1106 = vpack.c.b16 %v778, %v774
  %v1107 = vpack.c.b16 %v779, %v775
  %v1108 = vpack.c.b16 %v784, %v780
  %v1109 = vpack.c.b16 %v785, %v781
  %v1110 = vpack.c.b16 %v786, %v782
  %v1111 = vpack.c.b16 %v787, %v783
  %v1112 = vpack.c.b16 %v792, %v788
  %v1113 = vpack.c.b16 %v793, %v789
  %v1114 = vpack.c.b16 %v794, %v790
  %v1115 = vpack.c.b16 %v795, %v791
  %v1116 = vpack.c.b16 %v800, %v796
  %v1117 = vpack.c.b16 %v801, %v797
  %v1118 = vpack.c.b16 %v802, %v798
  %v1119 = vpack.c.b16 %v803, %v799
  %v1120 = vpack.c.b16 %v808, %v804
  %v1121 = vpack.c.b16 %v809, %v805
  %v1122 = vpack.c.b16 %v810, %v806
  %v1123 = vpack.c.b16 %v811, %v807
  %v1124 = vpack.c.b16 %v816, %v812
  %v1125 = vpack.c.b16 %v817, %v813
  %v1126 = vpack.c.b16 %v818, %v814
  %v1127 = vpack.c.b16 %v819, %v815
  %v1128 = vpack.c.b16 %v824, %v820
  %v1129 = vpack.c.b16 %v825, %v821
  %v1130 = vpack.c.b16 %v826, %v822
  %v1131 = vpack.c.b16 %v827, %v823
  %v1132 = vpack.c.b16 %v832, %v828
  %v1133 = vpack.c.b16 %v833, %v829
  %v1134 = vpack.c.b16 %v834, %v830
  %v1135 = vpack.c.b16 %v835, %v831
  %v1136 = vpack.c.b16 %v840, %v836
  %v1137 = vpack.c.b16 %v841, %v837
  %v1138 = vpack.c.b16 %v842, %v838
  %v1139 = vpack.c.b16 %v843, %v839
  %v1140 = vpack.c.b16 %v848, %v844
  %v1141 = vpack.c.b16 %v849, %v845
  %v1142 = vpack.c.b16 %v850, %v846
  %v1143 = vpack.c.b16 %v851, %v847
  %v1144 = vpack.c.b16 %v856, %v852
  %v1145 = vpack.c.b16 %v857, %v853
  %v1146 = vpack.c.b16 %v858, %v854
  %v1147 = vpack.c.b16 %v859, %v855
  %v1148 = vpack.c.b16 %v864, %v860
  %v1149 = vpack.c.b16 %v865, %v861
  %v1150 = vpack.c.b16 %v866, %v862
  %v1151 = vpack.c.b16 %v867, %v863
  %v1152 = vpack.c.b16 %v872, %v868
  %v1153 = vpack.c.b16 %v873, %v869
  %v1154 = vpack.c.b16 %v874, %v870
  %v1155 = vpack.c.b16 %v875, %v871
  %v1156 = vpack.c.b16 %v880, %v876
  %v1157 = vpack.c.b16 %v881, %v877
  %v1158 = vpack.c.b16 %v882, %v878
  %v1159 = vpack.c.b16 %v883, %v879
  %v1160 = vpack.c.b16 %v888, %v884
  %v1161 = vpack.c.b16 %v889, %v885
  %v1162 = vpack.c.b16 %v890, %v886
  %v1163 = vpack.c.b16 %v891, %v887
  %v1164 = vpack.c.b16 %v896, %v892
  %v1165 = vpack.c.b16 %v897, %v893
  %v1166 = vpack.c.b16 %v898, %v894
  %v1167 = vpack.c.b16 %v899, %v895
  %v1168 = vpack.c.b16 %v904, %v900
  %v1169 = vpack.c.b16 %v905, %v901
  %v1170 = vpack.c.b16 %v906, %v902
  %v1171 = vpack.c.b16 %v907, %v903
  %v1172 = vpack.c.b16 %v912, %v908
  %v1173 = vpack.c.b16 %v913, %v909
  %v1174 = vpack.c.b16 %v914, %v910
  %v1175 = vpack.c.b16 %v915, %v911
  %v1176 = vpack.c.b16 %v920, %v916
  %v1177 = vpack.c.b16 %v921, %v917
  %v1178 = vpack.c.b16 %v922, %v918
  %v1179 = vpack.c.b16 %v923, %v919
  %v1180 = vpack.c.b16 %v928, %v924
  %v1181 = vpack.c.b16 %v929, %v925
  %v1182 = vpack.c.b16 %v930, %v926
  %v1183 = vpack.c.b16 %v931, %v927
  %v1184 = vpack.c.b16 %v936, %v932
  %v1185 = vpack.c.b16 %v937, %v933
  %v1186 = vpack.c.b16 %v938, %v934
  %v1187 = vpack.c.b16 %v939, %v935
  %v1188 = vpack.c.b16 %v944, %v940
  %v1189 = vpack.c.b16 %v945, %v941
  %v1190 = vpack.c.b16 %v946, %v942
  %v1191 = vpack.c.b16 %v947, %v943
  %v1192 = vpack.c.b16 %v952, %v948
  %v1193 = vpack.c.b16 %v953, %v949
  %v1194 = vpack.c.b16 %v954, %v950
  %v1195 = vpack.c.b16 %v955, %v951
  %v1196 = vpack.c.b16 %v960, %v956
  %v1197 = vpack.c.b16 %v961, %v957
  %v1198 = vpack.c.b16 %v962, %v958
  %v1199 = vpack.c.b16 %v963, %v959
  %v1200 = vpack.c.b16 %v968, %v964
  %v1201 = vpack.c.b16 %v969, %v965
  %v1202 = vpack.c.b16 %v970, %v966
  %v1203 = vpack.c.b16 %v971, %v967
  %v1204 = vpack.c.b16 %v976, %v972
  %v1205 = vpack.c.b16 %v977, %v973
  %v1206 = vpack.c.b16 %v978, %v974
  %v1207 = vpack.c.b16 %v979, %v975
  %v1208 = vpack.c.b16 %v984, %v980
  %v1209 = vpack.c.b16 %v985, %v981
  %v1210 = vpack.c.b16 %v986, %v982
  %v1211 = vpack.c.b16 %v987, %v983
  %1436 = vmatpush.bf16.msra.mxu0 %v1016
  %1437 = vmatpush.bf16.msra.mxu0 %v1012
  %1438 = vmatpush.bf16.msra.mxu0 %v1008
  %1439 = vmatpush.bf16.msra.mxu0 %v1004
  %1440 = vmatpush.bf16.msra.mxu0 %v1000
  %1441 = vmatpush.bf16.msra.mxu0 %v996
  %1442 = vmatpush.bf16.msra.mxu0 %v992
  %1443 = vmatpush.bf16.msra.mxu0 %v988
  %1444 = vmatmul.bf16.gmra.mxu0 %v302
  %v1445 = vpop.f32.mrf.mxu0
  %v1446 = vadd.f32 %v272, %v1445
  %v1447 = vpop.f32.mrf.mxu0
  %v1448 = vadd.f32 %v272, %v1447
  %1449 = vdwg.mxu0
  %1450 = vmatpush.bf16.msra.mxu0 %v1048
  %1451 = vmatpush.bf16.msra.mxu0 %v1044
  %1452 = vmatpush.bf16.msra.mxu0 %v1040
  %1453 = vmatpush.bf16.msra.mxu0 %v1036
  %1454 = vmatpush.bf16.msra.mxu0 %v1032
  %1455 = vmatpush.bf16.msra.mxu0 %v1028
  %1456 = vmatpush.bf16.msra.mxu0 %v1024
  %1457 = vmatpush.bf16.msra.mxu0 %v1020
  %1458 = vmatmul.bf16.gmra.mxu0 %v303
  %v1459 = vpop.f32.mrf.mxu0
  %v1460 = vadd.f32 %v1446, %v1459
  %v1461 = vpop.f32.mrf.mxu0
  %v1462 = vadd.f32 %v1448, %v1461
  %1463 = vdwg.mxu0
  %1464 = vmatpush.bf16.msra.mxu0 %v1080
  %1465 = vmatpush.bf16.msra.mxu0 %v1076
  %1466 = vmatpush.bf16.msra.mxu0 %v1072
  %1467 = vmatpush.bf16.msra.mxu0 %v1068
  %1468 = vmatpush.bf16.msra.mxu0 %v1064
  %1469 = vmatpush.bf16.msra.mxu0 %v1060
  %1470 = vmatpush.bf16.msra.mxu0 %v1056
  %1471 = vmatpush.bf16.msra.mxu0 %v1052
  %1472 = vmatmul.bf16.gmra.mxu0 %v304
  %v1473 = vpop.f32.mrf.mxu0
  %v1474 = vadd.f32 %v1460, %v1473
  %v1475 = vpop.f32.mrf.mxu0
  %v1476 = vadd.f32 %v1462, %v1475
  %1477 = vdwg.mxu0
  %1478 = vmatpush.bf16.msra.mxu0 %v1112
  %1479 = vmatpush.bf16.msra.mxu0 %v1108
  %1480 = vmatpush.bf16.msra.mxu0 %v1104
  %1481 = vmatpush.bf16.msra.mxu0 %v1100
  %1482 = vmatpush.bf16.msra.mxu0 %v1096
  %1483 = vmatpush.bf16.msra.mxu0 %v1092
  %1484 = vmatpush.bf16.msra.mxu0 %v1088
  %1485 = vmatpush.bf16.msra.mxu0 %v1084
  %1486 = vmatmul.bf16.gmra.mxu0 %v305
  %v1487 = vpop.f32.mrf.mxu0
  %v1488 = vadd.f32 %v1474, %v1487
  %v1489 = vpop.f32.mrf.mxu0
  %v1490 = vadd.f32 %v1476, %v1489
  %1491 = vdwg.mxu0
  %1492 = vmatpush.bf16.msra.mxu0 %v1144
  %1493 = vmatpush.bf16.msra.mxu0 %v1140
  %1494 = vmatpush.bf16.msra.mxu0 %v1136
  %1495 = vmatpush.bf16.msra.mxu0 %v1132
  %1496 = vmatpush.bf16.msra.mxu0 %v1128
  %1497 = vmatpush.bf16.msra.mxu0 %v1124
  %1498 = vmatpush.bf16.msra.mxu0 %v1120
  %1499 = vmatpush.bf16.msra.mxu0 %v1116
  %1500 = vmatmul.bf16.gmra.mxu0 %v306
  %v1501 = vpop.f32.mrf.mxu0
  %v1502 = vadd.f32 %v1488, %v1501
  %v1503 = vpop.f32.mrf.mxu0
  %v1504 = vadd.f32 %v1490, %v1503
  %1505 = vdwg.mxu0
  %1506 = vmatpush.bf16.msra.mxu0 %v1176
  %1507 = vmatpush.bf16.msra.mxu0 %v1172
  %1508 = vmatpush.bf16.msra.mxu0 %v1168
  %1509 = vmatpush.bf16.msra.mxu0 %v1164
  %1510 = vmatpush.bf16.msra.mxu0 %v1160
  %1511 = vmatpush.bf16.msra.mxu0 %v1156
  %1512 = vmatpush.bf16.msra.mxu0 %v1152
  %1513 = vmatpush.bf16.msra.mxu0 %v1148
  %1514 = vmatmul.bf16.gmra.mxu0 %v307
  %v1515 = vpop.f32.mrf.mxu0
  %v1516 = vadd.f32 %v1502, %v1515
  %v1517 = vpop.f32.mrf.mxu0
  %v1518 = vadd.f32 %v1504, %v1517
  %1519 = vdwg.mxu0
  %1520 = vmatpush.bf16.msra.mxu0 %v1208
  %1521 = vmatpush.bf16.msra.mxu0 %v1204
  %1522 = vmatpush.bf16.msra.mxu0 %v1200
  %1523 = vmatpush.bf16.msra.mxu0 %v1196
  %1524 = vmatpush.bf16.msra.mxu0 %v1192
  %1525 = vmatpush.bf16.msra.mxu0 %v1188
  %1526 = vmatpush.bf16.msra.mxu0 %v1184
  %1527 = vmatpush.bf16.msra.mxu0 %v1180
  %1528 = vmatmul.bf16.gmra.mxu0 %v308
  %v1529 = vpop.f32.mrf.mxu0
  %v1530 = vadd.f32 %v1516, %v1529
  %v1531 = vpop.f32.mrf.mxu0
  %v1532 = vadd.f32 %v1518, %v1531
  %1533 = vdwg.mxu0
  %1534 = vmatpush.bf16.msra.mxu0 %v1017
  %1535 = vmatpush.bf16.msra.mxu0 %v1013
  %1536 = vmatpush.bf16.msra.mxu0 %v1009
  %1537 = vmatpush.bf16.msra.mxu0 %v1005
  %1538 = vmatpush.bf16.msra.mxu0 %v1001
  %1539 = vmatpush.bf16.msra.mxu0 %v997
  %1540 = vmatpush.bf16.msra.mxu0 %v993
  %1541 = vmatpush.bf16.msra.mxu0 %v989
  %1542 = vmatmul.bf16.gmra.mxu0 %v302
  %v1543 = vpop.f32.mrf.mxu0
  %v1544 = vadd.f32 %v273, %v1543
  %v1545 = vpop.f32.mrf.mxu0
  %v1546 = vadd.f32 %v273, %v1545
  %1547 = vdwg.mxu0
  %1548 = vmatpush.bf16.msra.mxu0 %v1049
  %1549 = vmatpush.bf16.msra.mxu0 %v1045
  %1550 = vmatpush.bf16.msra.mxu0 %v1041
  %1551 = vmatpush.bf16.msra.mxu0 %v1037
  %1552 = vmatpush.bf16.msra.mxu0 %v1033
  %1553 = vmatpush.bf16.msra.mxu0 %v1029
  %1554 = vmatpush.bf16.msra.mxu0 %v1025
  %1555 = vmatpush.bf16.msra.mxu0 %v1021
  %1556 = vmatmul.bf16.gmra.mxu0 %v303
  %v1557 = vpop.f32.mrf.mxu0
  %v1558 = vadd.f32 %v1544, %v1557
  %v1559 = vpop.f32.mrf.mxu0
  %v1560 = vadd.f32 %v1546, %v1559
  %1561 = vdwg.mxu0
  %1562 = vmatpush.bf16.msra.mxu0 %v1081
  %1563 = vmatpush.bf16.msra.mxu0 %v1077
  %1564 = vmatpush.bf16.msra.mxu0 %v1073
  %1565 = vmatpush.bf16.msra.mxu0 %v1069
  %1566 = vmatpush.bf16.msra.mxu0 %v1065
  %1567 = vmatpush.bf16.msra.mxu0 %v1061
  %1568 = vmatpush.bf16.msra.mxu0 %v1057
  %1569 = vmatpush.bf16.msra.mxu0 %v1053
  %1570 = vmatmul.bf16.gmra.mxu0 %v304
  %v1571 = vpop.f32.mrf.mxu0
  %v1572 = vadd.f32 %v1558, %v1571
  %v1573 = vpop.f32.mrf.mxu0
  %v1574 = vadd.f32 %v1560, %v1573
  %1575 = vdwg.mxu0
  %1576 = vmatpush.bf16.msra.mxu0 %v1113
  %1577 = vmatpush.bf16.msra.mxu0 %v1109
  %1578 = vmatpush.bf16.msra.mxu0 %v1105
  %1579 = vmatpush.bf16.msra.mxu0 %v1101
  %1580 = vmatpush.bf16.msra.mxu0 %v1097
  %1581 = vmatpush.bf16.msra.mxu0 %v1093
  %1582 = vmatpush.bf16.msra.mxu0 %v1089
  %1583 = vmatpush.bf16.msra.mxu0 %v1085
  %1584 = vmatmul.bf16.gmra.mxu0 %v305
  %v1585 = vpop.f32.mrf.mxu0
  %v1586 = vadd.f32 %v1572, %v1585
  %v1587 = vpop.f32.mrf.mxu0
  %v1588 = vadd.f32 %v1574, %v1587
  %1589 = vdwg.mxu0
  %1590 = vmatpush.bf16.msra.mxu0 %v1145
  %1591 = vmatpush.bf16.msra.mxu0 %v1141
  %1592 = vmatpush.bf16.msra.mxu0 %v1137
  %1593 = vmatpush.bf16.msra.mxu0 %v1133
  %1594 = vmatpush.bf16.msra.mxu0 %v1129
  %1595 = vmatpush.bf16.msra.mxu0 %v1125
  %1596 = vmatpush.bf16.msra.mxu0 %v1121
  %1597 = vmatpush.bf16.msra.mxu0 %v1117
  %1598 = vmatmul.bf16.gmra.mxu0 %v306
  %v1599 = vpop.f32.mrf.mxu0
  %v1600 = vadd.f32 %v1586, %v1599
  %v1601 = vpop.f32.mrf.mxu0
  %v1602 = vadd.f32 %v1588, %v1601
  %1603 = vdwg.mxu0
  %1604 = vmatpush.bf16.msra.mxu0 %v1177
  %1605 = vmatpush.bf16.msra.mxu0 %v1173
  %1606 = vmatpush.bf16.msra.mxu0 %v1169
  %1607 = vmatpush.bf16.msra.mxu0 %v1165
  %1608 = vmatpush.bf16.msra.mxu0 %v1161
  %1609 = vmatpush.bf16.msra.mxu0 %v1157
  %1610 = vmatpush.bf16.msra.mxu0 %v1153
  %1611 = vmatpush.bf16.msra.mxu0 %v1149
  %1612 = vmatmul.bf16.gmra.mxu0 %v307
  %v1613 = vpop.f32.mrf.mxu0
  %v1614 = vadd.f32 %v1600, %v1613
  %v1615 = vpop.f32.mrf.mxu0
  %v1616 = vadd.f32 %v1602, %v1615
  %1617 = vdwg.mxu0
  %1618 = vmatpush.bf16.msra.mxu0 %v1209
  %1619 = vmatpush.bf16.msra.mxu0 %v1205
  %1620 = vmatpush.bf16.msra.mxu0 %v1201
  %1621 = vmatpush.bf16.msra.mxu0 %v1197
  %1622 = vmatpush.bf16.msra.mxu0 %v1193
  %1623 = vmatpush.bf16.msra.mxu0 %v1189
  %1624 = vmatpush.bf16.msra.mxu0 %v1185
  %1625 = vmatpush.bf16.msra.mxu0 %v1181
  %1626 = vmatmul.bf16.gmra.mxu0 %v308
  %v1627 = vpop.f32.mrf.mxu0
  %v1628 = vadd.f32 %v1614, %v1627
  %v1629 = vpop.f32.mrf.mxu0
  %v1630 = vadd.f32 %v1616, %v1629
  %1631 = vdwg.mxu0
  %1632 = vmatpush.bf16.msra.mxu0 %v1018
  %1633 = vmatpush.bf16.msra.mxu0 %v1014
  %1634 = vmatpush.bf16.msra.mxu0 %v1010
  %1635 = vmatpush.bf16.msra.mxu0 %v1006
  %1636 = vmatpush.bf16.msra.mxu0 %v1002
  %1637 = vmatpush.bf16.msra.mxu0 %v998
  %1638 = vmatpush.bf16.msra.mxu0 %v994
  %1639 = vmatpush.bf16.msra.mxu0 %v990
  %1640 = vmatmul.bf16.gmra.mxu0 %v302
  %v1641 = vpop.f32.mrf.mxu0
  %v1642 = vadd.f32 %v274, %v1641
  %v1643 = vpop.f32.mrf.mxu0
  %v1644 = vadd.f32 %v274, %v1643
  %1645 = vdwg.mxu0
  %1646 = vmatpush.bf16.msra.mxu0 %v1050
  %1647 = vmatpush.bf16.msra.mxu0 %v1046
  %1648 = vmatpush.bf16.msra.mxu0 %v1042
  %1649 = vmatpush.bf16.msra.mxu0 %v1038
  %1650 = vmatpush.bf16.msra.mxu0 %v1034
  %1651 = vmatpush.bf16.msra.mxu0 %v1030
  %1652 = vmatpush.bf16.msra.mxu0 %v1026
  %1653 = vmatpush.bf16.msra.mxu0 %v1022
  %1654 = vmatmul.bf16.gmra.mxu0 %v303
  %v1655 = vpop.f32.mrf.mxu0
  %v1656 = vadd.f32 %v1642, %v1655
  %v1657 = vpop.f32.mrf.mxu0
  %v1658 = vadd.f32 %v1644, %v1657
  %1659 = vdwg.mxu0
  %1660 = vmatpush.bf16.msra.mxu0 %v1082
  %1661 = vmatpush.bf16.msra.mxu0 %v1078
  %1662 = vmatpush.bf16.msra.mxu0 %v1074
  %1663 = vmatpush.bf16.msra.mxu0 %v1070
  %1664 = vmatpush.bf16.msra.mxu0 %v1066
  %1665 = vmatpush.bf16.msra.mxu0 %v1062
  %1666 = vmatpush.bf16.msra.mxu0 %v1058
  %1667 = vmatpush.bf16.msra.mxu0 %v1054
  %1668 = vmatmul.bf16.gmra.mxu0 %v304
  %v1669 = vpop.f32.mrf.mxu0
  %v1670 = vadd.f32 %v1656, %v1669
  %v1671 = vpop.f32.mrf.mxu0
  %v1672 = vadd.f32 %v1658, %v1671
  %1673 = vdwg.mxu0
  %1674 = vmatpush.bf16.msra.mxu0 %v1114
  %1675 = vmatpush.bf16.msra.mxu0 %v1110
  %1676 = vmatpush.bf16.msra.mxu0 %v1106
  %1677 = vmatpush.bf16.msra.mxu0 %v1102
  %1678 = vmatpush.bf16.msra.mxu0 %v1098
  %1679 = vmatpush.bf16.msra.mxu0 %v1094
  %1680 = vmatpush.bf16.msra.mxu0 %v1090
  %1681 = vmatpush.bf16.msra.mxu0 %v1086
  %1682 = vmatmul.bf16.gmra.mxu0 %v305
  %v1683 = vpop.f32.mrf.mxu0
  %v1684 = vadd.f32 %v1670, %v1683
  %v1685 = vpop.f32.mrf.mxu0
  %v1686 = vadd.f32 %v1672, %v1685
  %1687 = vdwg.mxu0
  %1688 = vmatpush.bf16.msra.mxu0 %v1146
  %1689 = vmatpush.bf16.msra.mxu0 %v1142
  %1690 = vmatpush.bf16.msra.mxu0 %v1138
  %1691 = vmatpush.bf16.msra.mxu0 %v1134
  %1692 = vmatpush.bf16.msra.mxu0 %v1130
  %1693 = vmatpush.bf16.msra.mxu0 %v1126
  %1694 = vmatpush.bf16.msra.mxu0 %v1122
  %1695 = vmatpush.bf16.msra.mxu0 %v1118
  %1696 = vmatmul.bf16.gmra.mxu0 %v306
  %v1697 = vpop.f32.mrf.mxu0
  %v1698 = vadd.f32 %v1684, %v1697
  %v1699 = vpop.f32.mrf.mxu0
  %v1700 = vadd.f32 %v1686, %v1699
  %1701 = vdwg.mxu0
  %1702 = vmatpush.bf16.msra.mxu0 %v1178
  %1703 = vmatpush.bf16.msra.mxu0 %v1174
  %1704 = vmatpush.bf16.msra.mxu0 %v1170
  %1705 = vmatpush.bf16.msra.mxu0 %v1166
  %1706 = vmatpush.bf16.msra.mxu0 %v1162
  %1707 = vmatpush.bf16.msra.mxu0 %v1158
  %1708 = vmatpush.bf16.msra.mxu0 %v1154
  %1709 = vmatpush.bf16.msra.mxu0 %v1150
  %1710 = vmatmul.bf16.gmra.mxu0 %v307
  %v1711 = vpop.f32.mrf.mxu0
  %v1712 = vadd.f32 %v1698, %v1711
  %v1713 = vpop.f32.mrf.mxu0
  %v1714 = vadd.f32 %v1700, %v1713
  %1715 = vdwg.mxu0
  %1716 = vmatpush.bf16.msra.mxu0 %v1210
  %1717 = vmatpush.bf16.msra.mxu0 %v1206
  %1718 = vmatpush.bf16.msra.mxu0 %v1202
  %1719 = vmatpush.bf16.msra.mxu0 %v1198
  %1720 = vmatpush.bf16.msra.mxu0 %v1194
  %1721 = vmatpush.bf16.msra.mxu0 %v1190
  %1722 = vmatpush.bf16.msra.mxu0 %v1186
  %1723 = vmatpush.bf16.msra.mxu0 %v1182
  %1724 = vmatmul.bf16.gmra.mxu0 %v308
  %v1725 = vpop.f32.mrf.mxu0
  %v1726 = vadd.f32 %v1712, %v1725
  %v1727 = vpop.f32.mrf.mxu0
  %v1728 = vadd.f32 %v1714, %v1727
  %1729 = vdwg.mxu0
  %1730 = vmatpush.bf16.msra.mxu0 %v1019
  %1731 = vmatpush.bf16.msra.mxu0 %v1015
  %1732 = vmatpush.bf16.msra.mxu0 %v1011
  %1733 = vmatpush.bf16.msra.mxu0 %v1007
  %1734 = vmatpush.bf16.msra.mxu0 %v1003
  %1735 = vmatpush.bf16.msra.mxu0 %v999
  %1736 = vmatpush.bf16.msra.mxu0 %v995
  %1737 = vmatpush.bf16.msra.mxu0 %v991
  %1738 = vmatmul.bf16.gmra.mxu0 %v302
  %v1739 = vpop.f32.mrf.mxu0
  %v1740 = vadd.f32 %v275, %v1739
  %v1741 = vpop.f32.mrf.mxu0
  %v1742 = vadd.f32 %v275, %v1741
  %1743 = vdwg.mxu0
  %1744 = vmatpush.bf16.msra.mxu0 %v1051
  %1745 = vmatpush.bf16.msra.mxu0 %v1047
  %1746 = vmatpush.bf16.msra.mxu0 %v1043
  %1747 = vmatpush.bf16.msra.mxu0 %v1039
  %1748 = vmatpush.bf16.msra.mxu0 %v1035
  %1749 = vmatpush.bf16.msra.mxu0 %v1031
  %1750 = vmatpush.bf16.msra.mxu0 %v1027
  %1751 = vmatpush.bf16.msra.mxu0 %v1023
  %1752 = vmatmul.bf16.gmra.mxu0 %v303
  %v1753 = vpop.f32.mrf.mxu0
  %v1754 = vadd.f32 %v1740, %v1753
  %v1755 = vpop.f32.mrf.mxu0
  %v1756 = vadd.f32 %v1742, %v1755
  %1757 = vdwg.mxu0
  %1758 = vmatpush.bf16.msra.mxu0 %v1083
  %1759 = vmatpush.bf16.msra.mxu0 %v1079
  %1760 = vmatpush.bf16.msra.mxu0 %v1075
  %1761 = vmatpush.bf16.msra.mxu0 %v1071
  %1762 = vmatpush.bf16.msra.mxu0 %v1067
  %1763 = vmatpush.bf16.msra.mxu0 %v1063
  %1764 = vmatpush.bf16.msra.mxu0 %v1059
  %1765 = vmatpush.bf16.msra.mxu0 %v1055
  %1766 = vmatmul.bf16.gmra.mxu0 %v304
  %v1767 = vpop.f32.mrf.mxu0
  %v1768 = vadd.f32 %v1754, %v1767
  %v1769 = vpop.f32.mrf.mxu0
  %v1770 = vadd.f32 %v1756, %v1769
  %1771 = vdwg.mxu0
  %1772 = vmatpush.bf16.msra.mxu0 %v1115
  %1773 = vmatpush.bf16.msra.mxu0 %v1111
  %1774 = vmatpush.bf16.msra.mxu0 %v1107
  %1775 = vmatpush.bf16.msra.mxu0 %v1103
  %1776 = vmatpush.bf16.msra.mxu0 %v1099
  %1777 = vmatpush.bf16.msra.mxu0 %v1095
  %1778 = vmatpush.bf16.msra.mxu0 %v1091
  %1779 = vmatpush.bf16.msra.mxu0 %v1087
  %1780 = vmatmul.bf16.gmra.mxu0 %v305
  %v1781 = vpop.f32.mrf.mxu0
  %v1782 = vadd.f32 %v1768, %v1781
  %v1783 = vpop.f32.mrf.mxu0
  %v1784 = vadd.f32 %v1770, %v1783
  %1785 = vdwg.mxu0
  %1786 = vmatpush.bf16.msra.mxu0 %v1147
  %1787 = vmatpush.bf16.msra.mxu0 %v1143
  %1788 = vmatpush.bf16.msra.mxu0 %v1139
  %1789 = vmatpush.bf16.msra.mxu0 %v1135
  %1790 = vmatpush.bf16.msra.mxu0 %v1131
  %1791 = vmatpush.bf16.msra.mxu0 %v1127
  %1792 = vmatpush.bf16.msra.mxu0 %v1123
  %1793 = vmatpush.bf16.msra.mxu0 %v1119
  %1794 = vmatmul.bf16.gmra.mxu0 %v306
  %v1795 = vpop.f32.mrf.mxu0
  %v1796 = vadd.f32 %v1782, %v1795
  %v1797 = vpop.f32.mrf.mxu0
  %v1798 = vadd.f32 %v1784, %v1797
  %1799 = vdwg.mxu0
  %1800 = vmatpush.bf16.msra.mxu0 %v1179
  %1801 = vmatpush.bf16.msra.mxu0 %v1175
  %1802 = vmatpush.bf16.msra.mxu0 %v1171
  %1803 = vmatpush.bf16.msra.mxu0 %v1167
  %1804 = vmatpush.bf16.msra.mxu0 %v1163
  %1805 = vmatpush.bf16.msra.mxu0 %v1159
  %1806 = vmatpush.bf16.msra.mxu0 %v1155
  %1807 = vmatpush.bf16.msra.mxu0 %v1151
  %1808 = vmatmul.bf16.gmra.mxu0 %v307
  %v1809 = vpop.f32.mrf.mxu0
  %v1810 = vadd.f32 %v1796, %v1809
  %v1811 = vpop.f32.mrf.mxu0
  %v1812 = vadd.f32 %v1798, %v1811
  %1813 = vdwg.mxu0
  %1814 = vmatpush.bf16.msra.mxu0 %v1211
  %1815 = vmatpush.bf16.msra.mxu0 %v1207
  %1816 = vmatpush.bf16.msra.mxu0 %v1203
  %1817 = vmatpush.bf16.msra.mxu0 %v1199
  %1818 = vmatpush.bf16.msra.mxu0 %v1195
  %1819 = vmatpush.bf16.msra.mxu0 %v1191
  %1820 = vmatpush.bf16.msra.mxu0 %v1187
  %1821 = vmatpush.bf16.msra.mxu0 %v1183
  %1822 = vmatmul.bf16.gmra.mxu0 %v308
  %v1823 = vpop.f32.mrf.mxu0
  %v1824 = vadd.f32 %v1810, %v1823
  %v1825 = vpop.f32.mrf.mxu0
  %v1826 = vadd.f32 %v1812, %v1825
  %1827 = vdwg.mxu0
  %v1828 = vmax.f32 %v1530, 0.0
  %v1829 = vmax.f32 %v1628, 0.0
  %v1830 = vmax.f32 %v1726, 0.0
  %v1831 = vmax.f32 %v1824, 0.0
  %v1832 = vmax.f32 %v1532, 0.0
  %v1833 = vmax.f32 %v1630, 0.0
  %v1834 = vmax.f32 %v1728, 0.0
  %v1835 = vmax.f32 %v1826, 0.0
  %v1836 = vpack.c.bf16 %v1832, %v1828
  %v1837 = vpack.c.bf16 %v1833, %v1829
  %v1838 = vpack.c.bf16 %v1834, %v1830
  %v1839 = vpack.c.bf16 %v1835, %v1831
  %v1840 = vld [vmem:[%s3] sm:$0xff]
  %v1841 = vld [vmem:[%s3 + $0x8] sm:$0xff]
  %v1842 = vld [vmem:[%s3 + $0x10] sm:$0xff]
  %v1843 = vld [vmem:[%s3 + $0x18] sm:$0xff]
  %v1844 = vld [vmem:[%s3 + $0x20] sm:$0xff]
  %v1845 = vld [vmem:[%s3 + $0x28] sm:$0xff]
  %v1846 = vld [vmem:[%s3 + $0x30] sm:$0xff]
  %v1847 = vld [vmem:[%s3 + $0x38] sm:$0xff]
  %v1848 = vld [vmem:[%s3 + $0x40] sm:$0xff]
  %v1849 = vld [vmem:[%s3 + $0x48] sm:$0xff]
  %v1850 = vld [vmem:[%s3 + $0x50] sm:$0xff]
  %v1851 = vld [vmem:[%s3 + $0x58] sm:$0xff]
  %v1852 = vld [vmem:[%s3 + $0x60] sm:$0xff]
  %v1853 = vld [vmem:[%s3 + $0x68] sm:$0xff]
  %v1854 = vld [vmem:[%s3 + $0x70] sm:$0xff]
  %v1855 = vld [vmem:[%s3 + $0x78] sm:$0xff]
  %v1856 = vld [vmem:[%s3 + $0x80] sm:$0xff]
  %v1857 = vld [vmem:[%s3 + $0x88] sm:$0xff]
  %v1858 = vld [vmem:[%s3 + $0x90] sm:$0xff]
  %v1859 = vld [vmem:[%s3 + $0x98] sm:$0xff]
  %v1860 = vld [vmem:[%s3 + $0xa0] sm:$0xff]
  %v1861 = vld [vmem:[%s3 + $0xa8] sm:$0xff]
  %v1862 = vld [vmem:[%s3 + $0xb0] sm:$0xff]
  %v1863 = vld [vmem:[%s3 + $0xb8] sm:$0xff]
  %v1864 = vld [vmem:[%s3 + $0xc0] sm:$0xff]
  %v1865 = vld [vmem:[%s3 + $0xc8] sm:$0xff]
  %v1866 = vld [vmem:[%s3 + $0xd0] sm:$0xff]
  %v1867 = vld [vmem:[%s3 + $0xd8] sm:$0xff]
  %v1868 = vld [vmem:[%s3 + $0xe0] sm:$0xff]
  %v1869 = vld [vmem:[%s3 + $0xe8] sm:$0xff]
  %v1870 = vld [vmem:[%s3 + $0xf0] sm:$0xff]
  %v1871 = vld [vmem:[%s3 + $0xf8] sm:$0xff]
  %v1872 = vld [vmem:[%s3 + $0x100] sm:$0xff]
  %v1873 = vld [vmem:[%s3 + $0x108] sm:$0xff]
  %v1874 = vld [vmem:[%s3 + $0x110] sm:$0xff]
  %v1875 = vld [vmem:[%s3 + $0x118] sm:$0xff]
  %v1876 = vld [vmem:[%s3 + $0x120] sm:$0xff]
  %v1877 = vld [vmem:[%s3 + $0x128] sm:$0xff]
  %v1878 = vld [vmem:[%s3 + $0x130] sm:$0xff]
  %v1879 = vld [vmem:[%s3 + $0x138] sm:$0xff]
  %v1880 = vld [vmem:[%s3 + $0x140] sm:$0xff]
  %v1881 = vld [vmem:[%s3 + $0x148] sm:$0xff]
  %v1882 = vld [vmem:[%s3 + $0x150] sm:$0xff]
  %v1883 = vld [vmem:[%s3 + $0x158] sm:$0xff]
  %v1884 = vld [vmem:[%s3 + $0x160] sm:$0xff]
  %v1885 = vld [vmem:[%s3 + $0x168] sm:$0xff]
  %v1886 = vld [vmem:[%s3 + $0x170] sm:$0xff]
  %v1887 = vld [vmem:[%s3 + $0x178] sm:$0xff]
  %v1888 = vld [vmem:[%s3 + $0x180] sm:$0xff]
  %v1889 = vld [vmem:[%s3 + $0x188] sm:$0xff]
  %v1890 = vld [vmem:[%s3 + $0x190] sm:$0xff]
  %v1891 = vld [vmem:[%s3 + $0x198] sm:$0xff]
  %v1892 = vld [vmem:[%s3 + $0x1a0] sm:$0xff]
  %v1893 = vld [vmem:[%s3 + $0x1a8] sm:$0xff]
  %v1894 = vld [vmem:[%s3 + $0x1b0] sm:$0xff]
  %v1895 = vld [vmem:[%s3 + $0x1b8] sm:$0xff]
  %v1896 = vld [vmem:[%s3 + $0x1c0] sm:$0xff]
  %v1897 = vld [vmem:[%s3 + $0x1c8] sm:$0xff]
  %v1898 = vld [vmem:[%s3 + $0x1d0] sm:$0xff]
  %v1899 = vld [vmem:[%s3 + $0x1d8] sm:$0xff]
  %v1900 = vld [vmem:[%s3 + $0x1e0] sm:$0xff]
  %v1901 = vld [vmem:[%s3 + $0x1e8] sm:$0xff]
  %v1902 = vld [vmem:[%s3 + $0x1f0] sm:$0xff]
  %v1903 = vld [vmem:[%s3 + $0x1f8] sm:$0xff]
  %v1904 = vld [vmem:[%s4] sm:$0x3]
  %v1906 = vperm.slane %v1904, 0
  %v1907 = vperm.slane %v1904, 1
  %v1974 = vunpack.c.l.b16 %v1840
  %v1975 = vunpack.c.h.b16 %v1840
  %v1976 = vunpack.c.l.b16 %v1841
  %v1977 = vunpack.c.h.b16 %v1841
  %v1978 = vunpack.c.l.b16 %v1842
  %v1979 = vunpack.c.h.b16 %v1842
  %v1980 = vunpack.c.l.b16 %v1843
  %v1981 = vunpack.c.h.b16 %v1843
  %v1982 = vunpack.c.l.b16 %v1844
  %v1983 = vunpack.c.h.b16 %v1844
  %v1984 = vunpack.c.l.b16 %v1845
  %v1985 = vunpack.c.h.b16 %v1845
  %v1986 = vunpack.c.l.b16 %v1846
  %v1987 = vunpack.c.h.b16 %v1846
  %v1988 = vunpack.c.l.b16 %v1847
  %v1989 = vunpack.c.h.b16 %v1847
  %v1990 = vunpack.c.l.b16 %v1848
  %v1991 = vunpack.c.h.b16 %v1848
  %v1992 = vunpack.c.l.b16 %v1849
  %v1993 = vunpack.c.h.b16 %v1849
  %v1994 = vunpack.c.l.b16 %v1850
  %v1995 = vunpack.c.h.b16 %v1850
  %v1996 = vunpack.c.l.b16 %v1851
  %v1997 = vunpack.c.h.b16 %v1851
  %v1998 = vunpack.c.l.b16 %v1852
  %v1999 = vunpack.c.h.b16 %v1852
  %v2000 = vunpack.c.l.b16 %v1853
  %v2001 = vunpack.c.h.b16 %v1853
  %v2002 = vunpack.c.l.b16 %v1854
  %v2003 = vunpack.c.h.b16 %v1854
  %v2004 = vunpack.c.l.b16 %v1855
  %v2005 = vunpack.c.h.b16 %v1855
  %v2006 = vunpack.c.l.b16 %v1856
  %v2007 = vunpack.c.h.b16 %v1856
  %v2008 = vunpack.c.l.b16 %v1857
  %v2009 = vunpack.c.h.b16 %v1857
  %v2010 = vunpack.c.l.b16 %v1858
  %v2011 = vunpack.c.h.b16 %v1858
  %v2012 = vunpack.c.l.b16 %v1859
  %v2013 = vunpack.c.h.b16 %v1859
  %v2014 = vunpack.c.l.b16 %v1860
  %v2015 = vunpack.c.h.b16 %v1860
  %v2016 = vunpack.c.l.b16 %v1861
  %v2017 = vunpack.c.h.b16 %v1861
  %v2018 = vunpack.c.l.b16 %v1862
  %v2019 = vunpack.c.h.b16 %v1862
  %v2020 = vunpack.c.l.b16 %v1863
  %v2021 = vunpack.c.h.b16 %v1863
  %v2022 = vunpack.c.l.b16 %v1864
  %v2023 = vunpack.c.h.b16 %v1864
  %v2024 = vunpack.c.l.b16 %v1865
  %v2025 = vunpack.c.h.b16 %v1865
  %v2026 = vunpack.c.l.b16 %v1866
  %v2027 = vunpack.c.h.b16 %v1866
  %v2028 = vunpack.c.l.b16 %v1867
  %v2029 = vunpack.c.h.b16 %v1867
  %v2030 = vunpack.c.l.b16 %v1868
  %v2031 = vunpack.c.h.b16 %v1868
  %v2032 = vunpack.c.l.b16 %v1869
  %v2033 = vunpack.c.h.b16 %v1869
  %v2034 = vunpack.c.l.b16 %v1870
  %v2035 = vunpack.c.h.b16 %v1870
  %v2036 = vunpack.c.l.b16 %v1871
  %v2037 = vunpack.c.h.b16 %v1871
  %v2038 = vunpack.c.l.b16 %v1872
  %v2039 = vunpack.c.h.b16 %v1872
  %v2040 = vunpack.c.l.b16 %v1873
  %v2041 = vunpack.c.h.b16 %v1873
  %v2042 = vunpack.c.l.b16 %v1874
  %v2043 = vunpack.c.h.b16 %v1874
  %v2044 = vunpack.c.l.b16 %v1875
  %v2045 = vunpack.c.h.b16 %v1875
  %v2046 = vunpack.c.l.b16 %v1876
  %v2047 = vunpack.c.h.b16 %v1876
  %v2048 = vunpack.c.l.b16 %v1877
  %v2049 = vunpack.c.h.b16 %v1877
  %v2050 = vunpack.c.l.b16 %v1878
  %v2051 = vunpack.c.h.b16 %v1878
  %v2052 = vunpack.c.l.b16 %v1879
  %v2053 = vunpack.c.h.b16 %v1879
  %v2054 = vunpack.c.l.b16 %v1880
  %v2055 = vunpack.c.h.b16 %v1880
  %v2056 = vunpack.c.l.b16 %v1881
  %v2057 = vunpack.c.h.b16 %v1881
  %v2058 = vunpack.c.l.b16 %v1882
  %v2059 = vunpack.c.h.b16 %v1882
  %v2060 = vunpack.c.l.b16 %v1883
  %v2061 = vunpack.c.h.b16 %v1883
  %v2062 = vunpack.c.l.b16 %v1884
  %v2063 = vunpack.c.h.b16 %v1884
  %v2064 = vunpack.c.l.b16 %v1885
  %v2065 = vunpack.c.h.b16 %v1885
  %v2066 = vunpack.c.l.b16 %v1886
  %v2067 = vunpack.c.h.b16 %v1886
  %v2068 = vunpack.c.l.b16 %v1887
  %v2069 = vunpack.c.h.b16 %v1887
  %v2070 = vunpack.c.l.b16 %v1888
  %v2071 = vunpack.c.h.b16 %v1888
  %v2072 = vunpack.c.l.b16 %v1889
  %v2073 = vunpack.c.h.b16 %v1889
  %v2074 = vunpack.c.l.b16 %v1890
  %v2075 = vunpack.c.h.b16 %v1890
  %v2076 = vunpack.c.l.b16 %v1891
  %v2077 = vunpack.c.h.b16 %v1891
  %v2078 = vunpack.c.l.b16 %v1892
  %v2079 = vunpack.c.h.b16 %v1892
  %v2080 = vunpack.c.l.b16 %v1893
  %v2081 = vunpack.c.h.b16 %v1893
  %v2082 = vunpack.c.l.b16 %v1894
  %v2083 = vunpack.c.h.b16 %v1894
  %v2084 = vunpack.c.l.b16 %v1895
  %v2085 = vunpack.c.h.b16 %v1895
  %v2086 = vunpack.c.l.b16 %v1896
  %v2087 = vunpack.c.h.b16 %v1896
  %v2088 = vunpack.c.l.b16 %v1897
  %v2089 = vunpack.c.h.b16 %v1897
  %v2090 = vunpack.c.l.b16 %v1898
  %v2091 = vunpack.c.h.b16 %v1898
  %v2092 = vunpack.c.l.b16 %v1899
  %v2093 = vunpack.c.h.b16 %v1899
  %v2094 = vunpack.c.l.b16 %v1900
  %v2095 = vunpack.c.h.b16 %v1900
  %v2096 = vunpack.c.l.b16 %v1901
  %v2097 = vunpack.c.h.b16 %v1901
  %v2098 = vunpack.c.l.b16 %v1902
  %v2099 = vunpack.c.h.b16 %v1902
  %v2100 = vunpack.c.l.b16 %v1903
  %v2101 = vunpack.c.h.b16 %v1903
  %v2102 = vpack.c.b16 %v1976, %v1974
  %v2103 = vpack.c.b16 %v1977, %v1975
  %v2104 = vpack.c.b16 %v1980, %v1978
  %v2105 = vpack.c.b16 %v1981, %v1979
  %v2106 = vpack.c.b16 %v1984, %v1982
  %v2107 = vpack.c.b16 %v1985, %v1983
  %v2108 = vpack.c.b16 %v1988, %v1986
  %v2109 = vpack.c.b16 %v1989, %v1987
  %v2110 = vpack.c.b16 %v1992, %v1990
  %v2111 = vpack.c.b16 %v1993, %v1991
  %v2112 = vpack.c.b16 %v1996, %v1994
  %v2113 = vpack.c.b16 %v1997, %v1995
  %v2114 = vpack.c.b16 %v2000, %v1998
  %v2115 = vpack.c.b16 %v2001, %v1999
  %v2116 = vpack.c.b16 %v2004, %v2002
  %v2117 = vpack.c.b16 %v2005, %v2003
  %v2118 = vpack.c.b16 %v2008, %v2006
  %v2119 = vpack.c.b16 %v2009, %v2007
  %v2120 = vpack.c.b16 %v2012, %v2010
  %v2121 = vpack.c.b16 %v2013, %v2011
  %v2122 = vpack.c.b16 %v2016, %v2014
  %v2123 = vpack.c.b16 %v2017, %v2015
  %v2124 = vpack.c.b16 %v2020, %v2018
  %v2125 = vpack.c.b16 %v2021, %v2019
  %v2126 = vpack.c.b16 %v2024, %v2022
  %v2127 = vpack.c.b16 %v2025, %v2023
  %v2128 = vpack.c.b16 %v2028, %v2026
  %v2129 = vpack.c.b16 %v2029, %v2027
  %v2130 = vpack.c.b16 %v2032, %v2030
  %v2131 = vpack.c.b16 %v2033, %v2031
  %v2132 = vpack.c.b16 %v2036, %v2034
  %v2133 = vpack.c.b16 %v2037, %v2035
  %v2134 = vpack.c.b16 %v2040, %v2038
  %v2135 = vpack.c.b16 %v2041, %v2039
  %v2136 = vpack.c.b16 %v2044, %v2042
  %v2137 = vpack.c.b16 %v2045, %v2043
  %v2138 = vpack.c.b16 %v2048, %v2046
  %v2139 = vpack.c.b16 %v2049, %v2047
  %v2140 = vpack.c.b16 %v2052, %v2050
  %v2141 = vpack.c.b16 %v2053, %v2051
  %v2142 = vpack.c.b16 %v2056, %v2054
  %v2143 = vpack.c.b16 %v2057, %v2055
  %v2144 = vpack.c.b16 %v2060, %v2058
  %v2145 = vpack.c.b16 %v2061, %v2059
  %v2146 = vpack.c.b16 %v2064, %v2062
  %v2147 = vpack.c.b16 %v2065, %v2063
  %v2148 = vpack.c.b16 %v2068, %v2066
  %v2149 = vpack.c.b16 %v2069, %v2067
  %v2150 = vpack.c.b16 %v2072, %v2070
  %v2151 = vpack.c.b16 %v2073, %v2071
  %v2152 = vpack.c.b16 %v2076, %v2074
  %v2153 = vpack.c.b16 %v2077, %v2075
  %v2154 = vpack.c.b16 %v2080, %v2078
  %v2155 = vpack.c.b16 %v2081, %v2079
  %v2156 = vpack.c.b16 %v2084, %v2082
  %v2157 = vpack.c.b16 %v2085, %v2083
  %v2158 = vpack.c.b16 %v2088, %v2086
  %v2159 = vpack.c.b16 %v2089, %v2087
  %v2160 = vpack.c.b16 %v2092, %v2090
  %v2161 = vpack.c.b16 %v2093, %v2091
  %v2162 = vpack.c.b16 %v2096, %v2094
  %v2163 = vpack.c.b16 %v2097, %v2095
  %v2164 = vpack.c.b16 %v2100, %v2098
  %v2165 = vpack.c.b16 %v2101, %v2099
  %2230 = vmatpush.bf16.msra.mxu0 %v2116
  %2231 = vmatpush.bf16.msra.mxu0 %v2114
  %2232 = vmatpush.bf16.msra.mxu0 %v2112
  %2233 = vmatpush.bf16.msra.mxu0 %v2110
  %2234 = vmatpush.bf16.msra.mxu0 %v2108
  %2235 = vmatpush.bf16.msra.mxu0 %v2106
  %2236 = vmatpush.bf16.msra.mxu0 %v2104
  %2237 = vmatpush.bf16.msra.mxu0 %v2102
  %2238 = vmatmul.bf16.gmra.mxu0 %v1836
  %v2239 = vpop.f32.mrf.mxu0
  %v2240 = vadd.f32 %v1906, %v2239
  %v2241 = vpop.f32.mrf.mxu0
  %v2242 = vadd.f32 %v1906, %v2241
  %2243 = vdwg.mxu0
  %2244 = vmatpush.bf16.msra.mxu0 %v2132
  %2245 = vmatpush.bf16.msra.mxu0 %v2130
  %2246 = vmatpush.bf16.msra.mxu0 %v2128
  %2247 = vmatpush.bf16.msra.mxu0 %v2126
  %2248 = vmatpush.bf16.msra.mxu0 %v2124
  %2249 = vmatpush.bf16.msra.mxu0 %v2122
  %2250 = vmatpush.bf16.msra.mxu0 %v2120
  %2251 = vmatpush.bf16.msra.mxu0 %v2118
  %2252 = vmatmul.bf16.gmra.mxu0 %v1837
  %v2253 = vpop.f32.mrf.mxu0
  %v2254 = vadd.f32 %v2240, %v2253
  %v2255 = vpop.f32.mrf.mxu0
  %v2256 = vadd.f32 %v2242, %v2255
  %2257 = vdwg.mxu0
  %2258 = vmatpush.bf16.msra.mxu0 %v2148
  %2259 = vmatpush.bf16.msra.mxu0 %v2146
  %2260 = vmatpush.bf16.msra.mxu0 %v2144
  %2261 = vmatpush.bf16.msra.mxu0 %v2142
  %2262 = vmatpush.bf16.msra.mxu0 %v2140
  %2263 = vmatpush.bf16.msra.mxu0 %v2138
  %2264 = vmatpush.bf16.msra.mxu0 %v2136
  %2265 = vmatpush.bf16.msra.mxu0 %v2134
  %2266 = vmatmul.bf16.gmra.mxu0 %v1838
  %v2267 = vpop.f32.mrf.mxu0
  %v2268 = vadd.f32 %v2254, %v2267
  %v2269 = vpop.f32.mrf.mxu0
  %v2270 = vadd.f32 %v2256, %v2269
  %2271 = vdwg.mxu0
  %2272 = vmatpush.bf16.msra.mxu0 %v2164
  %2273 = vmatpush.bf16.msra.mxu0 %v2162
  %2274 = vmatpush.bf16.msra.mxu0 %v2160
  %2275 = vmatpush.bf16.msra.mxu0 %v2158
  %2276 = vmatpush.bf16.msra.mxu0 %v2156
  %2277 = vmatpush.bf16.msra.mxu0 %v2154
  %2278 = vmatpush.bf16.msra.mxu0 %v2152
  %2279 = vmatpush.bf16.msra.mxu0 %v2150
  %2280 = vmatmul.bf16.gmra.mxu0 %v1839
  %v2281 = vpop.f32.mrf.mxu0
  %v2282 = vadd.f32 %v2268, %v2281
  %v2283 = vpop.f32.mrf.mxu0
  %v2284 = vadd.f32 %v2270, %v2283
  %2285 = vdwg.mxu0
  %2286 = vmatpush.bf16.msra.mxu0 %v2117
  %2287 = vmatpush.bf16.msra.mxu0 %v2115
  %2288 = vmatpush.bf16.msra.mxu0 %v2113
  %2289 = vmatpush.bf16.msra.mxu0 %v2111
  %2290 = vmatpush.bf16.msra.mxu0 %v2109
  %2291 = vmatpush.bf16.msra.mxu0 %v2107
  %2292 = vmatpush.bf16.msra.mxu0 %v2105
  %2293 = vmatpush.bf16.msra.mxu0 %v2103
  %2294 = vmatmul.bf16.gmra.mxu0 %v1836
  %v2295 = vpop.f32.mrf.mxu0
  %v2296 = vadd.f32 %v1907, %v2295
  %v2297 = vpop.f32.mrf.mxu0
  %v2298 = vadd.f32 %v1907, %v2297
  %2299 = vdwg.mxu0
  %2300 = vmatpush.bf16.msra.mxu0 %v2133
  %2301 = vmatpush.bf16.msra.mxu0 %v2131
  %2302 = vmatpush.bf16.msra.mxu0 %v2129
  %2303 = vmatpush.bf16.msra.mxu0 %v2127
  %2304 = vmatpush.bf16.msra.mxu0 %v2125
  %2305 = vmatpush.bf16.msra.mxu0 %v2123
  %2306 = vmatpush.bf16.msra.mxu0 %v2121
  %2307 = vmatpush.bf16.msra.mxu0 %v2119
  %2308 = vmatmul.bf16.gmra.mxu0 %v1837
  %v2309 = vpop.f32.mrf.mxu0
  %v2310 = vadd.f32 %v2296, %v2309
  %v2311 = vpop.f32.mrf.mxu0
  %v2312 = vadd.f32 %v2298, %v2311
  %2313 = vdwg.mxu0
  %2314 = vmatpush.bf16.msra.mxu0 %v2149
  %2315 = vmatpush.bf16.msra.mxu0 %v2147
  %2316 = vmatpush.bf16.msra.mxu0 %v2145
  %2317 = vmatpush.bf16.msra.mxu0 %v2143
  %2318 = vmatpush.bf16.msra.mxu0 %v2141
  %2319 = vmatpush.bf16.msra.mxu0 %v2139
  %2320 = vmatpush.bf16.msra.mxu0 %v2137
  %2321 = vmatpush.bf16.msra.mxu0 %v2135
  %2322 = vmatmul.bf16.gmra.mxu0 %v1838
  %v2323 = vpop.f32.mrf.mxu0
  %v2324 = vadd.f32 %v2310, %v2323
  %v2325 = vpop.f32.mrf.mxu0
  %v2326 = vadd.f32 %v2312, %v2325
  %2327 = vdwg.mxu0
  %2328 = vmatpush.bf16.msra.mxu0 %v2165
  %2329 = vmatpush.bf16.msra.mxu0 %v2163
  %2330 = vmatpush.bf16.msra.mxu0 %v2161
  %2331 = vmatpush.bf16.msra.mxu0 %v2159
  %2332 = vmatpush.bf16.msra.mxu0 %v2157
  %2333 = vmatpush.bf16.msra.mxu0 %v2155
  %2334 = vmatpush.bf16.msra.mxu0 %v2153
  %2335 = vmatpush.bf16.msra.mxu0 %v2151
  %2336 = vmatmul.bf16.gmra.mxu0 %v1839
  %v2337 = vpop.f32.mrf.mxu0
  %v2338 = vadd.f32 %v2324, %v2337
  %v2339 = vpop.f32.mrf.mxu0
  %v2340 = vadd.f32 %v2326, %v2339
  %2341 = vdwg.mxu0
  %v2342 = vmax.f32 %v2282, 0.0
  %v2343 = vmax.f32 %v2338, 0.0
  %v2344 = vmax.f32 %v2284, 0.0
  %v2345 = vmax.f32 %v2340, 0.0
  %v2346 = vpack.c.bf16 %v2344, %v2342
  %v2347 = vpack.c.bf16 %v2345, %v2343
  %v2348 = vld [vmem:[%s5] sm:$0xf]
  %v2349 = vld [vmem:[%s5 + $0x4] sm:$0xf]
  %v2350 = vld [vmem:[%s5 + $0x8] sm:$0xf]
  %v2351 = vld [vmem:[%s5 + $0xc] sm:$0xf]
  %v2352 = vld [vmem:[%s5 + $0x10] sm:$0xf]
  %v2353 = vld [vmem:[%s5 + $0x14] sm:$0xf]
  %v2354 = vld [vmem:[%s5 + $0x18] sm:$0xf]
  %v2355 = vld [vmem:[%s5 + $0x1c] sm:$0xf]
  %v2356 = vld [vmem:[%s5 + $0x20] sm:$0xf]
  %v2357 = vld [vmem:[%s5 + $0x24] sm:$0xf]
  %v2358 = vld [vmem:[%s5 + $0x28] sm:$0xf]
  %v2359 = vld [vmem:[%s5 + $0x2c] sm:$0xf]
  %v2360 = vld [vmem:[%s5 + $0x30] sm:$0xf]
  %v2361 = vld [vmem:[%s5 + $0x34] sm:$0xf]
  %v2362 = vld [vmem:[%s5 + $0x38] sm:$0xf]
  %v2363 = vld [vmem:[%s5 + $0x3c] sm:$0xf]
  %v2364 = vld [vmem:[%s5 + $0x40] sm:$0xf]
  %v2365 = vld [vmem:[%s5 + $0x44] sm:$0xf]
  %v2366 = vld [vmem:[%s5 + $0x48] sm:$0xf]
  %v2367 = vld [vmem:[%s5 + $0x4c] sm:$0xf]
  %v2368 = vld [vmem:[%s5 + $0x50] sm:$0xf]
  %v2369 = vld [vmem:[%s5 + $0x54] sm:$0xf]
  %v2370 = vld [vmem:[%s5 + $0x58] sm:$0xf]
  %v2371 = vld [vmem:[%s5 + $0x5c] sm:$0xf]
  %v2372 = vld [vmem:[%s5 + $0x60] sm:$0xf]
  %v2373 = vld [vmem:[%s5 + $0x64] sm:$0xf]
  %v2374 = vld [vmem:[%s5 + $0x68] sm:$0xf]
  %v2375 = vld [vmem:[%s5 + $0x6c] sm:$0xf]
  %v2376 = vld [vmem:[%s5 + $0x70] sm:$0xf]
  %v2377 = vld [vmem:[%s5 + $0x74] sm:$0xf]
  %v2378 = vld [vmem:[%s5 + $0x78] sm:$0xf]
  %v2379 = vld [vmem:[%s5 + $0x7c] sm:$0xf]
  %v2380 = vld [vmem:[%s6] sm:$0x1]
  %v2382 = vperm.slane %v2380, 0
  %v2416 = vunpack.c.l.b16 %v2348
  %v2417 = vunpack.c.l.b16 %v2349
  %v2418 = vunpack.c.l.b16 %v2350
  %v2419 = vunpack.c.l.b16 %v2351
  %v2420 = vunpack.c.l.b16 %v2352
  %v2421 = vunpack.c.l.b16 %v2353
  %v2422 = vunpack.c.l.b16 %v2354
  %v2423 = vunpack.c.l.b16 %v2355
  %v2424 = vunpack.c.l.b16 %v2356
  %v2425 = vunpack.c.l.b16 %v2357
  %v2426 = vunpack.c.l.b16 %v2358
  %v2427 = vunpack.c.l.b16 %v2359
  %v2428 = vunpack.c.l.b16 %v2360
  %v2429 = vunpack.c.l.b16 %v2361
  %v2430 = vunpack.c.l.b16 %v2362
  %v2431 = vunpack.c.l.b16 %v2363
  %v2432 = vunpack.c.l.b16 %v2364
  %v2433 = vunpack.c.l.b16 %v2365
  %v2434 = vunpack.c.l.b16 %v2366
  %v2435 = vunpack.c.l.b16 %v2367
  %v2436 = vunpack.c.l.b16 %v2368
  %v2437 = vunpack.c.l.b16 %v2369
  %v2438 = vunpack.c.l.b16 %v2370
  %v2439 = vunpack.c.l.b16 %v2371
  %v2440 = vunpack.c.l.b16 %v2372
  %v2441 = vunpack.c.l.b16 %v2373
  %v2442 = vunpack.c.l.b16 %v2374
  %v2443 = vunpack.c.l.b16 %v2375
  %v2444 = vunpack.c.l.b16 %v2376
  %v2445 = vunpack.c.l.b16 %v2377
  %v2446 = vunpack.c.l.b16 %v2378
  %v2447 = vunpack.c.l.b16 %v2379
  %v2448 = vpack.c.b16 %v2417, %v2416
  %v2449 = vpack.c.b16 %v2419, %v2418
  %v2450 = vpack.c.b16 %v2421, %v2420
  %v2451 = vpack.c.b16 %v2423, %v2422
  %v2452 = vpack.c.b16 %v2425, %v2424
  %v2453 = vpack.c.b16 %v2427, %v2426
  %v2454 = vpack.c.b16 %v2429, %v2428
  %v2455 = vpack.c.b16 %v2431, %v2430
  %v2456 = vpack.c.b16 %v2433, %v2432
  %v2457 = vpack.c.b16 %v2435, %v2434
  %v2458 = vpack.c.b16 %v2437, %v2436
  %v2459 = vpack.c.b16 %v2439, %v2438
  %v2460 = vpack.c.b16 %v2441, %v2440
  %v2461 = vpack.c.b16 %v2443, %v2442
  %v2462 = vpack.c.b16 %v2445, %v2444
  %v2463 = vpack.c.b16 %v2447, %v2446
  %2480 = vmatpush.bf16.msra.mxu0 %v2455
  %2481 = vmatpush.bf16.msra.mxu0 %v2454
  %2482 = vmatpush.bf16.msra.mxu0 %v2453
  %2483 = vmatpush.bf16.msra.mxu0 %v2452
  %2484 = vmatpush.bf16.msra.mxu0 %v2451
  %2485 = vmatpush.bf16.msra.mxu0 %v2450
  %2486 = vmatpush.bf16.msra.mxu0 %v2449
  %2487 = vmatpush.bf16.msra.mxu0 %v2448
  %2488 = vmatmul.bf16.gmra.mxu0 %v2346
  %v2489 = vpop.f32.mrf.mxu0
  %v2490 = vadd.f32 %v2382, %v2489
  %v2491 = vpop.f32.mrf.mxu0
  %v2492 = vadd.f32 %v2382, %v2491
  %2493 = vdwg.mxu0
  %2494 = vmatpush.bf16.msra.mxu0 %v2463
  %2495 = vmatpush.bf16.msra.mxu0 %v2462
  %2496 = vmatpush.bf16.msra.mxu0 %v2461
  %2497 = vmatpush.bf16.msra.mxu0 %v2460
  %2498 = vmatpush.bf16.msra.mxu0 %v2459
  %2499 = vmatpush.bf16.msra.mxu0 %v2458
  %2500 = vmatpush.bf16.msra.mxu0 %v2457
  %2501 = vmatpush.bf16.msra.mxu0 %v2456
  %2502 = vmatmul.bf16.gmra.mxu0 %v2347
  %v2503 = vpop.f32.mrf.mxu0
  %v2504 = vadd.f32 %v2490, %v2503
  %v2505 = vpop.f32.mrf.mxu0
  %v2506 = vadd.f32 %v2492, %v2505
  %2507 = vdwg.mxu0
  %v2508 = vmax.f32 %v2504, 0.0
  %v2509 = vmax.f32 %v2506, 0.0
  %v2510 = vpack.c.bf16 %v2509, %v2508
  %v2511 = vld [vmem:[%s7] sm:$0xf]
  %v2512 = vld [vmem:[%s7 + $0x4] sm:$0xf]
  %v2513 = vld [vmem:[%s7 + $0x8] sm:$0xf]
  %v2514 = vld [vmem:[%s7 + $0xc] sm:$0xf]
  %v2515 = vld [vmem:[%s7 + $0x10] sm:$0xf]
  %v2516 = vld [vmem:[%s7 + $0x14] sm:$0xf]
  %v2517 = vld [vmem:[%s7 + $0x18] sm:$0xf]
  %v2518 = vld [vmem:[%s7 + $0x1c] sm:$0xf]
  %v2519 = vld [vmem:[%s7 + $0x20] sm:$0xf]
  %v2520 = vld [vmem:[%s7 + $0x24] sm:$0xf]
  %v2521 = vld [vmem:[%s7 + $0x28] sm:$0xf]
  %v2522 = vld [vmem:[%s7 + $0x2c] sm:$0xf]
  %v2523 = vld [vmem:[%s7 + $0x30] sm:$0xf]
  %v2524 = vld [vmem:[%s7 + $0x34] sm:$0xf]
  %v2525 = vld [vmem:[%s7 + $0x38] sm:$0xf]
  %v2526 = vld [vmem:[%s7 + $0x3c] sm:$0xf]
  %v2527 = vld [vmem:[%s8] sm:$0x1]
  %v2529 = vperm.slane %v2527, 0
  %v2547 = vunpack.c.l.b16 %v2511
  %v2548 = vunpack.c.l.b16 %v2512
  %v2549 = vunpack.c.l.b16 %v2513
  %v2550 = vunpack.c.l.b16 %v2514
  %v2551 = vunpack.c.l.b16 %v2515
  %v2552 = vunpack.c.l.b16 %v2516
  %v2553 = vunpack.c.l.b16 %v2517
  %v2554 = vunpack.c.l.b16 %v2518
  %v2555 = vunpack.c.l.b16 %v2519
  %v2556 = vunpack.c.l.b16 %v2520
  %v2557 = vunpack.c.l.b16 %v2521
  %v2558 = vunpack.c.l.b16 %v2522
  %v2559 = vunpack.c.l.b16 %v2523
  %v2560 = vunpack.c.l.b16 %v2524
  %v2561 = vunpack.c.l.b16 %v2525
  %v2562 = vunpack.c.l.b16 %v2526
  %v2563 = vpack.c.b16 %v2548, %v2547
  %v2564 = vpack.c.b16 %v2550, %v2549
  %v2565 = vpack.c.b16 %v2552, %v2551
  %v2566 = vpack.c.b16 %v2554, %v2553
  %v2567 = vpack.c.b16 %v2556, %v2555
  %v2568 = vpack.c.b16 %v2558, %v2557
  %v2569 = vpack.c.b16 %v2560, %v2559
  %v2570 = vpack.c.b16 %v2562, %v2561
  %2579 = vmatpush.bf16.msra.mxu0 %v2570
  %2580 = vmatpush.bf16.msra.mxu0 %v2569
  %2581 = vmatpush.bf16.msra.mxu0 %v2568
  %2582 = vmatpush.bf16.msra.mxu0 %v2567
  %2583 = vmatpush.bf16.msra.mxu0 %v2566
  %2584 = vmatpush.bf16.msra.mxu0 %v2565
  %2585 = vmatpush.bf16.msra.mxu0 %v2564
  %2586 = vmatpush.bf16.msra.mxu0 %v2563
  %2587 = vmatmul.bf16.gmra.mxu0 %v2510
  %v2588 = vpop.f32.mrf.mxu0
  %v2589 = vadd.f32 %v2529, %v2588
  %v2590 = vpop.f32.mrf.mxu0
  %v2591 = vadd.f32 %v2529, %v2590
  %2592 = vdwg.mxu0
  %v2593 = vmax.f32 %v2589, 0.0
  %v2594 = vmax.f32 %v2591, 0.0
  %v2595 = vpack.c.bf16 %v2594, %v2593
  %v2596 = vld [vmem:[%s9] sm:$0xf]
  %v2597 = vld [vmem:[%s9 + $0x4] sm:$0xf]
  %v2598 = vld [vmem:[%s9 + $0x8] sm:$0xf]
  %v2599 = vld [vmem:[%s9 + $0xc] sm:$0xf]
  %v2600 = vld [vmem:[%s9 + $0x10] sm:$0xf]
  %v2601 = vld [vmem:[%s9 + $0x14] sm:$0xf]
  %v2602 = vld [vmem:[%s9 + $0x18] sm:$0xf]
  %v2603 = vld [vmem:[%s9 + $0x1c] sm:$0xf]
  %v2604 = vld [vmem:[%s9 + $0x20] sm:$0xf]
  %v2605 = vld [vmem:[%s9 + $0x24] sm:$0xf]
  %v2606 = vld [vmem:[%s9 + $0x28] sm:$0xf]
  %v2607 = vld [vmem:[%s9 + $0x2c] sm:$0xf]
  %v2608 = vld [vmem:[%s9 + $0x30] sm:$0xf]
  %v2609 = vld [vmem:[%s9 + $0x34] sm:$0xf]
  %v2610 = vld [vmem:[%s9 + $0x38] sm:$0xf]
  %v2611 = vld [vmem:[%s9 + $0x3c] sm:$0xf]
  %v2612 = vld [vmem:[%s10] sm:$0x1]
  %v2614 = vperm.slane %v2612, 0
  %v2632 = vunpack.c.l.b16 %v2596
  %v2633 = vunpack.c.l.b16 %v2597
  %v2634 = vunpack.c.l.b16 %v2598
  %v2635 = vunpack.c.l.b16 %v2599
  %v2636 = vunpack.c.l.b16 %v2600
  %v2637 = vunpack.c.l.b16 %v2601
  %v2638 = vunpack.c.l.b16 %v2602
  %v2639 = vunpack.c.l.b16 %v2603
  %v2640 = vunpack.c.l.b16 %v2604
  %v2641 = vunpack.c.l.b16 %v2605
  %v2642 = vunpack.c.l.b16 %v2606
  %v2643 = vunpack.c.l.b16 %v2607
  %v2644 = vunpack.c.l.b16 %v2608
  %v2645 = vunpack.c.l.b16 %v2609
  %v2646 = vunpack.c.l.b16 %v2610
  %v2647 = vunpack.c.l.b16 %v2611
  %v2648 = vpack.c.b16 %v2633, %v2632
  %v2649 = vpack.c.b16 %v2635, %v2634
  %v2650 = vpack.c.b16 %v2637, %v2636
  %v2651 = vpack.c.b16 %v2639, %v2638
  %v2652 = vpack.c.b16 %v2641, %v2640
  %v2653 = vpack.c.b16 %v2643, %v2642
  %v2654 = vpack.c.b16 %v2645, %v2644
  %v2655 = vpack.c.b16 %v2647, %v2646
  %2664 = vmatpush.bf16.msra.mxu0 %v2655
  %2665 = vmatpush.bf16.msra.mxu0 %v2654
  %2666 = vmatpush.bf16.msra.mxu0 %v2653
  %2667 = vmatpush.bf16.msra.mxu0 %v2652
  %2668 = vmatpush.bf16.msra.mxu0 %v2651
  %2669 = vmatpush.bf16.msra.mxu0 %v2650
  %2670 = vmatpush.bf16.msra.mxu0 %v2649
  %2671 = vmatpush.bf16.msra.mxu0 %v2648
  %2672 = vmatmul.bf16.gmra.mxu0 %v2595
  %v2673 = vpop.f32.mrf.mxu0
  %v2674 = vadd.f32 %v2614, %v2673
  %v2675 = vpop.f32.mrf.mxu0
  %v2676 = vadd.f32 %v2614, %v2675
  %2677 = vdwg.mxu0
  %2678 = vst [vmem:[%s11] sm:$0xff] %v2674
  %2679 = vst [vmem:[%s11 + $0x8] sm:$0xff] %v2676
  // Predicated region
  $region46: #{net_forward.1} parent=0 // pred_check
    _
  $region47: #{net_forward.1} parent=0 // pred_check_branch
    %2681 = sbr.rel (0) target = $region49
  $region48: #{net_forward.1} parent=0 // pred_region
    _
  $region49: #{net_forward.1} parent=0 // pred_fallthru
    _
  // Predicated region
  $region50: #{net_forward.1} parent=0 // pred_check
    _
  $region51: #{net_forward.1} parent=0 // pred_check_branch
    %2683 = sbr.rel (0) target = $region53
  $region52: #{net_forward.1} parent=0 // pred_region
    _
  $region53: #{net_forward.1} parent=0 // pred_fallthru
    _

</llo_original>
